<compile_context>
chip_gen: v5e
topology: v5e:2x2
jax: 0.10.0
libtpu: 0.0.40
codegen_flags: <defaults>
</compile_context>

<pallas_src>
import functools

import jax
import jax.numpy as jnp
from jax import lax
from jax.experimental import pallas as pl
from jax.experimental.pallas import tpu as pltpu


def _pairwise_scores_kernel(hq3_ref, hdbT_ref, w2_ref, b2_ref, out_ref, *,
                            hid_chunk):
  """Computes one (tile_q, tile_p) block of pairwise scores.

  hq3_ref : (tile_q//8, hid, 8)  query hidden activations, 8-row groups,
                                 hid on sublanes.
  hdbT_ref: (hid, tile_p)        doc hidden activations (+b1), transposed.
  w2_ref  : (hid, 1)             second-layer weight column.
  b2_ref  : (1, 1)  SMEM         second-layer bias scalar.
  out_ref : (tile_q, tile_p)     float32 scores block (lane-dense rows).
  """
  hid, tile_p = hdbT_ref.shape
  n_grp = hq3_ref.shape[0]
  n_chunk = hid // hid_chunk
  b2 = b2_ref[0, 0]

  # Hoisted out of the row loop (JAX does not CSE broadcast_in_dim): one lane
  # broadcast of w2 per grid step instead of one per (row, chunk).
  w2b = jnp.broadcast_to(w2_ref[...], (hid, tile_p))

  def group_body(g, carry):
    hq_grp = hq3_ref[g]                               # (hid, 8); dynamic LEADING index only.
    # Static 8-way unroll over the rows of this group: this is the unrolled
    # per-q-row loop from the perf review -- every lane index stays static and
    # the scheduler sees all 8 independent rows.
    for l in range(8):
      hq_col = hq_grp[:, l:l + 1]                     # (hid, 1), static lane slice.
      row = jnp.zeros((1, tile_p), jnp.float32)
      # Chunk the hidden axis so per-chunk slabs stay ~16 vregs: no full-size
      # f32 copy of a big intermediate, no VMEM spills, f32 partial sums.
      for c in range(n_chunk):
        lo = c * hid_chunk
        hi = lo + hid_chunk
        slab = jnp.maximum(hq_col[lo:hi, :] + hdbT_ref[lo:hi, :], 0.0)
        slab = slab * w2b[lo:hi, :]
        # Sublane-axis reduce (cross-vreg VPU adds + one 8-way fold), f32 acc.
        row = row + jnp.sum(slab, axis=0, keepdims=True, dtype=jnp.float32)
      out_ref[pl.ds(g * 8 + l, 1), :] = (row + b2).astype(out_ref.dtype)
    return carry

  lax.fori_loop(0, n_grp, group_body, 0)


def _round_up(x, m):
  return ((x + m - 1) // m) * m


def pairwise_scores_cls(query, doc, params, *, tile_q=128, tile_p=512,
                        hid_chunk=32, compute_dtype=jnp.float32):
  """query: (bs_q, dim), doc: (bs_p, dim) -> scores (bs_q, bs_p) float32."""
  w1, b1, w2, b2 = params["w1"], params["b1"], params["w2"], params["b2"]
  bs_q, dim = query.shape
  bs_p, _ = doc.shape
  hid = w1.shape[0]                                   # 128
  assert w2.shape[0] == 1, "forward is only coherent for out_dim == 1"
  assert hid % 8 == 0
  if hid % hid_chunk != 0 or hid_chunk % 8 != 0:
    hid_chunk = hid

  # --- First layer, hoisted to XLA (grid-invariant) --------------------------
  hq = jnp.dot(query, w1[:, :dim].T, preferred_element_type=jnp.float32,
               precision=lax.Precision.HIGHEST)
  hdb = jnp.dot(doc, w1[:, dim:].T, preferred_element_type=jnp.float32,
                precision=lax.Precision.HIGHEST) + b1

  hq = hq.astype(compute_dtype)
  hdb = hdb.astype(compute_dtype)
  w2_col = w2.reshape(hid, 1).astype(compute_dtype)
  b2_s = b2.reshape(1, 1).astype(jnp.float32)

  # --- Tile sizes (clamped for small batches) and zero padding ---------------
  tile_q = _round_up(max(8, min(tile_q, _round_up(bs_q, 8))), 8)
  tile_p = _round_up(max(128, min(tile_p, _round_up(bs_p, 128))), 128)
  bs_q_pad = _round_up(bs_q, tile_q)
  bs_p_pad = _round_up(bs_p, tile_p)
  if bs_q_pad != bs_q:
    hq = jnp.pad(hq, ((0, bs_q_pad - bs_q), (0, 0)))
  if bs_p_pad != bs_p:
    hdb = jnp.pad(hdb, ((0, bs_p_pad - bs_p), (0, 0)))

  # hq3[g, h, l] = hq[8*g + l, h] : query rows in 8-row groups, hid on sublanes.
  hq3 = hq.reshape(bs_q_pad // 8, 8, hid).transpose(0, 2, 1)
  # hdbT[h, j] = hdb[j, h] : hid on sublanes, doc index lane-dense.
  hdbT = hdb.T

  grid = (bs_q_pad // tile_q, bs_p_pad // tile_p)     # p is the minor (fast) axis.

  kernel = functools.partial(_pairwise_scores_kernel, hid_chunk=hid_chunk)
  out = pl.pallas_call(
      kernel,
      out_shape=jax.ShapeDtypeStruct((bs_q_pad, bs_p_pad), jnp.float32),
      grid_spec=pltpu.PrefetchScalarGridSpec(
          num_scalar_prefetch=0,
          grid=grid,
          in_specs=[
              pl.BlockSpec((tile_q // 8, hid, 8), lambda i, j: (i, 0, 0)),  # hq3
              pl.BlockSpec((hid, tile_p), lambda i, j: (0, j)),             # hdbT
              pl.BlockSpec((hid, 1), lambda i, j: (0, 0)),                  # w2 column
              pl.BlockSpec(memory_space=pltpu.MemorySpace.SMEM),            # b2 scalar
          ],
          out_specs=pl.BlockSpec((tile_q, tile_p), lambda i, j: (i, j)),
      ),
      compiler_params=pltpu.CompilerParams(
          dimension_semantics=("parallel", "parallel")),
  )(hq3, hdbT, w2_col, b2_s)
  # Padded rows/cols contain garbage (b2 only) and are sliced away here.
  return out[:bs_q, :bs_p]


def init_params(key, dim, hidden=128, out_dim=1):
  """Deterministic synthetic parameters matching the nn.Linear shapes."""
  k1, k2, k3, k4 = jax.random.split(key, 4)
  scale1 = 1.0 / jnp.sqrt(2.0 * dim)
  scale2 = 1.0 / jnp.sqrt(float(hidden))
  return {
      "w1": jax.random.normal(k1, (hidden, 2 * dim), jnp.float32) * scale1,
      "b1": jax.random.normal(k2, (hidden,), jnp.float32) * scale1,
      "w2": jax.random.normal(k3, (out_dim, hidden), jnp.float32) * scale2,
      "b2": jax.random.normal(k4, (out_dim,), jnp.float32) * scale2,
  }


def reference_forward(query, doc, params):
  """Pure-JAX replica of the PyTorch forward (out_dim == 1)."""
  w1, b1, w2, b2 = params["w1"], params["b1"], params["w2"], params["b2"]
  bs_q, dim = query.shape
  bs_p = doc.shape[0]
  q_exp = jnp.repeat(query, bs_p, axis=0)             # torch repeat(1, bs_p).view(-1, dim)
  d_exp = jnp.tile(doc, (bs_q, 1))                    # torch repeat(bs_q, 1)
  pair = jnp.concatenate([q_exp, d_exp], axis=-1)     # (bs_q*bs_p, 2*dim)
  h = jnp.maximum(
      jnp.dot(pair, w1.T, precision=lax.Precision.HIGHEST) + b1, 0.0)
  s = jnp.dot(h, w2.T, precision=lax.Precision.HIGHEST) + b2
  return s.squeeze(-1).reshape(bs_q, bs_p)


if __name__ == "__main__":
  key = jax.random.PRNGKey(0)
  kq, kd, kp = jax.random.split(key, 3)

  dim = 32
  params = init_params(kp, dim)

  # 1) Small shapes, not tile multiples (exercises pad / slice paths; grid 1x1).
  bs_q, bs_p = 20, 24
  query = jax.random.normal(kq, (bs_q, dim), jnp.float32)
  doc = jax.random.normal(kd, (bs_p, dim), jnp.float32)
  out = jax.block_until_ready(pairwise_scores_cls(query, doc, params))
  ref = reference_forward(query, doc, params)
  assert out.shape == (bs_q, bs_p)
  assert jnp.allclose(out, ref, atol=1e-4, rtol=1e-4), (
      f"f32 max abs err = {jnp.max(jnp.abs(out - ref))}")

  # 2) Multi-tile path: default 128x512 tiles -> 2x2 grid.
  bs_q2, bs_p2 = 150, 600
  q2 = jax.random.normal(kq, (bs_q2, dim), jnp.float32)
  d2 = jax.random.normal(kd, (bs_p2, dim), jnp.float32)
  out2 = jax.block_until_ready(pairwise_scores_cls(q2, d2, params))
  ref2 = reference_forward(q2, d2, params)
  assert out2.shape == (bs_q2, bs_p2)
  assert jnp.allclose(out2, ref2, atol=1e-4, rtol=1e-4), (
      f"f32 multi-tile max abs err = {jnp.max(jnp.abs(out2 - ref2))}")

  # 3) bf16 pairwise compute (recommended on v6e/v7x); f32 accumulation inside,
  #    so only a loose tolerance is needed vs the f32 reference.
  out_bf16 = jax.block_until_ready(
      pairwise_scores_cls(query, doc, params, compute_dtype=jnp.bfloat16))
  assert jnp.allclose(out_bf16, ref, atol=5e-2, rtol=5e-2), (
      f"bf16 max abs err = {jnp.max(jnp.abs(out_bf16 - ref))}")

  print("KERNEL_OK")
</pallas_src>

<mosaic_0001>
module attributes {stable_mosaic.version = 11 : i64} {
  func.func @_pairwise_scores_kernel(%arg0: i32, %arg1: i32, %arg2: memref<3x128x8xf32, #tpu.memory_space<vmem>>, %arg3: memref<128x128xf32, #tpu.memory_space<vmem>>, %arg4: memref<128x1xf32, #tpu.memory_space<vmem>>, %arg5: memref<1x1xf32, #tpu.memory_space<smem>>, %arg6: memref<24x128xf32, #tpu.memory_space<vmem>>) attributes {dimension_semantics = [#tpu.dimension_semantics<parallel>, #tpu.dimension_semantics<parallel>], iteration_bounds = array<i64: 1, 1>, scalar_prefetch = 0 : i64, scratch_operands = 0 : i64, tpu.core_type = #tpu.core_type<tc>, window_params = [{transform_indices = @transform_0, window_bounds = array<i64: 3, 128, 8>}, {transform_indices = @transform_1, window_bounds = array<i64: 128, 128>}, {pipeline_mode = #tpu.pipeline_mode<synchronous>, transform_indices = @transform_2, window_bounds = array<i64: 128, 1>}, {transform_indices = @transform_3, window_bounds = array<i64: 1, 1>}, {transform_indices = @transform_4, window_bounds = array<i64: 24, 128>}]} {
    %c0 = arith.constant 0 : index
    %c0_0 = arith.constant 0 : index
    %0 = memref.load %arg5[%c0, %c0_0] : memref<1x1xf32, #tpu.memory_space<smem>>
    %c0_1 = arith.constant 0 : index
    %c0_2 = arith.constant 0 : index
    %1 = vector.load %arg4[%c0_1, %c0_2] : memref<128x1xf32, #tpu.memory_space<vmem>>, vector<128x1xf32>
    %2 = vector.shape_cast %1 : vector<128x1xf32> to vector<128x1xf32>
    %3 = vector.broadcast %2 : vector<128x1xf32> to vector<128x128xf32>
    %c0_i32 = arith.constant 0 : i32
    %c3_i32 = arith.constant 3 : i32
    %4 = arith.addi %c0_i32, %c3_i32 : i32
    %c1_i32 = arith.constant 1 : i32
    scf.for %arg7 = %c0_i32 to %4 step %c1_i32  : i32 {
      %5 = arith.index_cast %arg7 : i32 to index
      %c0_4 = arith.constant 0 : index
      %c0_5 = arith.constant 0 : index
      %6 = vector.load %arg2[%5, %c0_4, %c0_5] : memref<3x128x8xf32, #tpu.memory_space<vmem>>, vector<1x128x8xf32>
      %7 = vector.shape_cast %6 : vector<1x128x8xf32> to vector<128x8xf32>
      %8 = vector.extract_strided_slice %7 {offsets = [0, 0], sizes = [128, 1], strides = [1, 1]} : vector<128x8xf32> to vector<128x1xf32>
      %cst = arith.constant 0.000000e+00 : f32
      %9 = vector.broadcast %cst : f32 to vector<1x128xf32>
      %10 = vector.extract_strided_slice %8 {offsets = [0, 0], sizes = [32, 1], strides = [1, 1]} : vector<128x1xf32> to vector<32x1xf32>
      %c0_6 = arith.constant 0 : index
      %c0_7 = arith.constant 0 : index
      %11 = vector.load %arg3[%c0_6, %c0_7] : memref<128x128xf32, #tpu.memory_space<vmem>>, vector<32x128xf32>
      %12 = vector.broadcast %10 : vector<32x1xf32> to vector<32x128xf32>
      %13 = arith.addf %12, %11 : vector<32x128xf32>
      %cst_8 = arith.constant 0.000000e+00 : f32
      %14 = vector.broadcast %cst_8 : f32 to vector<32x128xf32>
      %15 = arith.maximumf %13, %14 : vector<32x128xf32>
      %16 = vector.extract_strided_slice %3 {offsets = [0, 0], sizes = [32, 128], strides = [1, 1]} : vector<128x128xf32> to vector<32x128xf32>
      %17 = arith.mulf %15, %16 : vector<32x128xf32>
      %cst_9 = arith.constant dense<0.000000e+00> : vector<128xf32>
      %18 = vector.multi_reduction <add>, %17, %cst_9 [0] : vector<32x128xf32> to vector<128xf32>
      %19 = vector.shape_cast %18 : vector<128xf32> to vector<1x128xf32>
      %20 = arith.addf %9, %19 : vector<1x128xf32>
      %21 = vector.extract_strided_slice %8 {offsets = [32, 0], sizes = [32, 1], strides = [1, 1]} : vector<128x1xf32> to vector<32x1xf32>
      %c32 = arith.constant 32 : index
      %c0_10 = arith.constant 0 : index
      %22 = vector.load %arg3[%c32, %c0_10] : memref<128x128xf32, #tpu.memory_space<vmem>>, vector<32x128xf32>
      %23 = vector.broadcast %21 : vector<32x1xf32> to vector<32x128xf32>
      %24 = arith.addf %23, %22 : vector<32x128xf32>
      %cst_11 = arith.constant 0.000000e+00 : f32
      %25 = vector.broadcast %cst_11 : f32 to vector<32x128xf32>
      %26 = arith.maximumf %24, %25 : vector<32x128xf32>
      %27 = vector.extract_strided_slice %3 {offsets = [32, 0], sizes = [32, 128], strides = [1, 1]} : vector<128x128xf32> to vector<32x128xf32>
      %28 = arith.mulf %26, %27 : vector<32x128xf32>
      %cst_12 = arith.constant dense<0.000000e+00> : vector<128xf32>
      %29 = vector.multi_reduction <add>, %28, %cst_12 [0] : vector<32x128xf32> to vector<128xf32>
      %30 = vector.shape_cast %29 : vector<128xf32> to vector<1x128xf32>
      %31 = arith.addf %20, %30 : vector<1x128xf32>
      %32 = vector.extract_strided_slice %8 {offsets = [64, 0], sizes = [32, 1], strides = [1, 1]} : vector<128x1xf32> to vector<32x1xf32>
      %c64 = arith.constant 64 : index
      %c0_13 = arith.constant 0 : index
      %33 = vector.load %arg3[%c64, %c0_13] : memref<128x128xf32, #tpu.memory_space<vmem>>, vector<32x128xf32>
      %34 = vector.broadcast %32 : vector<32x1xf32> to vector<32x128xf32>
      %35 = arith.addf %34, %33 : vector<32x128xf32>
      %cst_14 = arith.constant 0.000000e+00 : f32
      %36 = vector.broadcast %cst_14 : f32 to vector<32x128xf32>
      %37 = arith.maximumf %35, %36 : vector<32x128xf32>
      %38 = vector.extract_strided_slice %3 {offsets = [64, 0], sizes = [32, 128], strides = [1, 1]} : vector<128x128xf32> to vector<32x128xf32>
      %39 = arith.mulf %37, %38 : vector<32x128xf32>
      %cst_15 = arith.constant dense<0.000000e+00> : vector<128xf32>
      %40 = vector.multi_reduction <add>, %39, %cst_15 [0] : vector<32x128xf32> to vector<128xf32>
      %41 = vector.shape_cast %40 : vector<128xf32> to vector<1x128xf32>
      %42 = arith.addf %31, %41 : vector<1x128xf32>
      %43 = vector.extract_strided_slice %8 {offsets = [96, 0], sizes = [32, 1], strides = [1, 1]} : vector<128x1xf32> to vector<32x1xf32>
      %c96 = arith.constant 96 : index
      %c0_16 = arith.constant 0 : index
      %44 = vector.load %arg3[%c96, %c0_16] : memref<128x128xf32, #tpu.memory_space<vmem>>, vector<32x128xf32>
      %45 = vector.broadcast %43 : vector<32x1xf32> to vector<32x128xf32>
      %46 = arith.addf %45, %44 : vector<32x128xf32>
      %cst_17 = arith.constant 0.000000e+00 : f32
      %47 = vector.broadcast %cst_17 : f32 to vector<32x128xf32>
      %48 = arith.maximumf %46, %47 : vector<32x128xf32>
      %49 = vector.extract_strided_slice %3 {offsets = [96, 0], sizes = [32, 128], strides = [1, 1]} : vector<128x128xf32> to vector<32x128xf32>
      %50 = arith.mulf %48, %49 : vector<32x128xf32>
      %cst_18 = arith.constant dense<0.000000e+00> : vector<128xf32>
      %51 = vector.multi_reduction <add>, %50, %cst_18 [0] : vector<32x128xf32> to vector<128xf32>
      %52 = vector.shape_cast %51 : vector<128xf32> to vector<1x128xf32>
      %53 = arith.addf %42, %52 : vector<1x128xf32>
      %54 = vector.broadcast %0 : f32 to vector<1x128xf32>
      %55 = arith.addf %53, %54 : vector<1x128xf32>
      %c8_i32 = arith.constant 8 : i32
      %56 = arith.muli %arg7, %c8_i32 : i32
      %c0_i32_19 = arith.constant 0 : i32
      %57 = arith.addi %56, %c0_i32_19 : i32
      %58 = arith.index_cast %57 : i32 to index
      %c0_20 = arith.constant 0 : index
      %59 = vector.load %arg6[%58, %c0_20] : memref<24x128xf32, #tpu.memory_space<vmem>>, vector<1x128xf32>
      tpu.vector_store %arg6[%58, %c0_20], %55 {strides = array<i32>} : memref<24x128xf32, #tpu.memory_space<vmem>>, vector<1x128xf32>,
      %60 = vector.extract_strided_slice %7 {offsets = [0, 1], sizes = [128, 1], strides = [1, 1]} : vector<128x8xf32> to vector<128x1xf32>
      %cst_21 = arith.constant 0.000000e+00 : f32
      %61 = vector.broadcast %cst_21 : f32 to vector<1x128xf32>
      %62 = vector.extract_strided_slice %60 {offsets = [0, 0], sizes = [32, 1], strides = [1, 1]} : vector<128x1xf32> to vector<32x1xf32>
      %c0_22 = arith.constant 0 : index
      %c0_23 = arith.constant 0 : index
      %63 = vector.load %arg3[%c0_22, %c0_23] : memref<128x128xf32, #tpu.memory_space<vmem>>, vector<32x128xf32>
      %64 = vector.broadcast %62 : vector<32x1xf32> to vector<32x128xf32>
      %65 = arith.addf %64, %63 : vector<32x128xf32>
      %cst_24 = arith.constant 0.000000e+00 : f32
      %66 = vector.broadcast %cst_24 : f32 to vector<32x128xf32>
      %67 = arith.maximumf %65, %66 : vector<32x128xf32>
      %68 = vector.extract_strided_slice %3 {offsets = [0, 0], sizes = [32, 128], strides = [1, 1]} : vector<128x128xf32> to vector<32x128xf32>
      %69 = arith.mulf %67, %68 : vector<32x128xf32>
      %cst_25 = arith.constant dense<0.000000e+00> : vector<128xf32>
      %70 = vector.multi_reduction <add>, %69, %cst_25 [0] : vector<32x128xf32> to vector<128xf32>
      %71 = vector.shape_cast %70 : vector<128xf32> to vector<1x128xf32>
      %72 = arith.addf %61, %71 : vector<1x128xf32>
      %73 = vector.extract_strided_slice %60 {offsets = [32, 0], sizes = [32, 1], strides = [1, 1]} : vector<128x1xf32> to vector<32x1xf32>
      %c32_26 = arith.constant 32 : index
      %c0_27 = arith.constant 0 : index
      %74 = vector.load %arg3[%c32_26, %c0_27] : memref<128x128xf32, #tpu.memory_space<vmem>>, vector<32x128xf32>
      %75 = vector.broadcast %73 : vector<32x1xf32> to vector<32x128xf32>
      %76 = arith.addf %75, %74 : vector<32x128xf32>
      %cst_28 = arith.constant 0.000000e+00 : f32
      %77 = vector.broadcast %cst_28 : f32 to vector<32x128xf32>
      %78 = arith.maximumf %76, %77 : vector<32x128xf32>
      %79 = vector.extract_strided_slice %3 {offsets = [32, 0], sizes = [32, 128], strides = [1, 1]} : vector<128x128xf32> to vector<32x128xf32>
      %80 = arith.mulf %78, %79 : vector<32x128xf32>
      %cst_29 = arith.constant dense<0.000000e+00> : vector<128xf32>
      %81 = vector.multi_reduction <add>, %80, %cst_29 [0] : vector<32x128xf32> to vector<128xf32>
      %82 = vector.shape_cast %81 : vector<128xf32> to vector<1x128xf32>
      %83 = arith.addf %72, %82 : vector<1x128xf32>
      %84 = vector.extract_strided_slice %60 {offsets = [64, 0], sizes = [32, 1], strides = [1, 1]} : vector<128x1xf32> to vector<32x1xf32>
      %c64_30 = arith.constant 64 : index
      %c0_31 = arith.constant 0 : index
      %85 = vector.load %arg3[%c64_30, %c0_31] : memref<128x128xf32, #tpu.memory_space<vmem>>, vector<32x128xf32>
      %86 = vector.broadcast %84 : vector<32x1xf32> to vector<32x128xf32>
      %87 = arith.addf %86, %85 : vector<32x128xf32>
      %cst_32 = arith.constant 0.000000e+00 : f32
      %88 = vector.broadcast %cst_32 : f32 to vector<32x128xf32>
      %89 = arith.maximumf %87, %88 : vector<32x128xf32>
      %90 = vector.extract_strided_slice %3 {offsets = [64, 0], sizes = [32, 128], strides = [1, 1]} : vector<128x128xf32> to vector<32x128xf32>
      %91 = arith.mulf %89, %90 : vector<32x128xf32>
      %cst_33 = arith.constant dense<0.000000e+00> : vector<128xf32>
      %92 = vector.multi_reduction <add>, %91, %cst_33 [0] : vector<32x128xf32> to vector<128xf32>
      %93 = vector.shape_cast %92 : vector<128xf32> to vector<1x128xf32>
      %94 = arith.addf %83, %93 : vector<1x128xf32>
      %95 = vector.extract_strided_slice %60 {offsets = [96, 0], sizes = [32, 1], strides = [1, 1]} : vector<128x1xf32> to vector<32x1xf32>
      %c96_34 = arith.constant 96 : index
      %c0_35 = arith.constant 0 : index
      %96 = vector.load %arg3[%c96_34, %c0_35] : memref<128x128xf32, #tpu.memory_space<vmem>>, vector<32x128xf32>
      %97 = vector.broadcast %95 : vector<32x1xf32> to vector<32x128xf32>
      %98 = arith.addf %97, %96 : vector<32x128xf32>
      %cst_36 = arith.constant 0.000000e+00 : f32
      %99 = vector.broadcast %cst_36 : f32 to vector<32x128xf32>
      %100 = arith.maximumf %98, %99 : vector<32x128xf32>
      %101 = vector.extract_strided_slice %3 {offsets = [96, 0], sizes = [32, 128], strides = [1, 1]} : vector<128x128xf32> to vector<32x128xf32>
      %102 = arith.mulf %100, %101 : vector<32x128xf32>
      %cst_37 = arith.constant dense<0.000000e+00> : vector<128xf32>
      %103 = vector.multi_reduction <add>, %102, %cst_37 [0] : vector<32x128xf32> to vector<128xf32>
      %104 = vector.shape_cast %103 : vector<128xf32> to vector<1x128xf32>
      %105 = arith.addf %94, %104 : vector<1x128xf32>
      %106 = vector.broadcast %0 : f32 to vector<1x128xf32>
      %107 = arith.addf %105, %106 : vector<1x128xf32>
      %c8_i32_38 = arith.constant 8 : i32
      %108 = arith.muli %arg7, %c8_i32_38 : i32
      %c1_i32_39 = arith.constant 1 : i32
      %109 = arith.addi %108, %c1_i32_39 : i32
      %110 = arith.index_cast %109 : i32 to index
      %c0_40 = arith.constant 0 : index
      %111 = vector.load %arg6[%110, %c0_40] : memref<24x128xf32, #tpu.memory_space<vmem>>, vector<1x128xf32>
      tpu.vector_store %arg6[%110, %c0_40], %107 {strides = array<i32>} : memref<24x128xf32, #tpu.memory_space<vmem>>, vector<1x128xf32>,
      %112 = vector.extract_strided_slice %7 {offsets = [0, 2], sizes = [128, 1], strides = [1, 1]} : vector<128x8xf32> to vector<128x1xf32>
      %cst_41 = arith.constant 0.000000e+00 : f32
      %113 = vector.broadcast %cst_41 : f32 to vector<1x128xf32>
      %114 = vector.extract_strided_slice %112 {offsets = [0, 0], sizes = [32, 1], strides = [1, 1]} : vector<128x1xf32> to vector<32x1xf32>
      %c0_42 = arith.constant 0 : index
      %c0_43 = arith.constant 0 : index
      %115 = vector.load %arg3[%c0_42, %c0_43] : memref<128x128xf32, #tpu.memory_space<vmem>>, vector<32x128xf32>
      %116 = vector.broadcast %114 : vector<32x1xf32> to vector<32x128xf32>
      %117 = arith.addf %116, %115 : vector<32x128xf32>
      %cst_44 = arith.constant 0.000000e+00 : f32
      %118 = vector.broadcast %cst_44 : f32 to vector<32x128xf32>
      %119 = arith.maximumf %117, %118 : vector<32x128xf32>
      %120 = vector.extract_strided_slice %3 {offsets = [0, 0], sizes = [32, 128], strides = [1, 1]} : vector<128x128xf32> to vector<32x128xf32>
      %121 = arith.mulf %119, %120 : vector<32x128xf32>
      %cst_45 = arith.constant dense<0.000000e+00> : vector<128xf32>
      %122 = vector.multi_reduction <add>, %121, %cst_45 [0] : vector<32x128xf32> to vector<128xf32>
      %123 = vector.shape_cast %122 : vector<128xf32> to vector<1x128xf32>
      %124 = arith.addf %113, %123 : vector<1x128xf32>
      %125 = vector.extract_strided_slice %112 {offsets = [32, 0], sizes = [32, 1], strides = [1, 1]} : vector<128x1xf32> to vector<32x1xf32>
      %c32_46 = arith.constant 32 : index
      %c0_47 = arith.constant 0 : index
      %126 = vector.load %arg3[%c32_46, %c0_47] : memref<128x128xf32, #tpu.memory_space<vmem>>, vector<32x128xf32>
      %127 = vector.broadcast %125 : vector<32x1xf32> to vector<32x128xf32>
      %128 = arith.addf %127, %126 : vector<32x128xf32>
      %cst_48 = arith.constant 0.000000e+00 : f32
      %129 = vector.broadcast %cst_48 : f32 to vector<32x128xf32>
      %130 = arith.maximumf %128, %129 : vector<32x128xf32>
      %131 = vector.extract_strided_slice %3 {offsets = [32, 0], sizes = [32, 128], strides = [1, 1]} : vector<128x128xf32> to vector<32x128xf32>
      %132 = arith.mulf %130, %131 : vector<32x128xf32>
      %cst_49 = arith.constant dense<0.000000e+00> : vector<128xf32>
      %133 = vector.multi_reduction <add>, %132, %cst_49 [0] : vector<32x128xf32> to vector<128xf32>
      %134 = vector.shape_cast %133 : vector<128xf32> to vector<1x128xf32>
      %135 = arith.addf %124, %134 : vector<1x128xf32>
      %136 = vector.extract_strided_slice %112 {offsets = [64, 0], sizes = [32, 1], strides = [1, 1]} : vector<128x1xf32> to vector<32x1xf32>
      %c64_50 = arith.constant 64 : index
      %c0_51 = arith.constant 0 : index
      %137 = vector.load %arg3[%c64_50, %c0_51] : memref<128x128xf32, #tpu.memory_space<vmem>>, vector<32x128xf32>
      %138 = vector.broadcast %136 : vector<32x1xf32> to vector<32x128xf32>
      %139 = arith.addf %138, %137 : vector<32x128xf32>
      %cst_52 = arith.constant 0.000000e+00 : f32
      %140 = vector.broadcast %cst_52 : f32 to vector<32x128xf32>
      %141 = arith.maximumf %139, %140 : vector<32x128xf32>
      %142 = vector.extract_strided_slice %3 {offsets = [64, 0], sizes = [32, 128], strides = [1, 1]} : vector<128x128xf32> to vector<32x128xf32>
      %143 = arith.mulf %141, %142 : vector<32x128xf32>
      %cst_53 = arith.constant dense<0.000000e+00> : vector<128xf32>
      %144 = vector.multi_reduction <add>, %143, %cst_53 [0] : vector<32x128xf32> to vector<128xf32>
      %145 = vector.shape_cast %144 : vector<128xf32> to vector<1x128xf32>
      %146 = arith.addf %135, %145 : vector<1x128xf32>
      %147 = vector.extract_strided_slice %112 {offsets = [96, 0], sizes = [32, 1], strides = [1, 1]} : vector<128x1xf32> to vector<32x1xf32>
      %c96_54 = arith.constant 96 : index
      %c0_55 = arith.constant 0 : index
      %148 = vector.load %arg3[%c96_54, %c0_55] : memref<128x128xf32, #tpu.memory_space<vmem>>, vector<32x128xf32>
      %149 = vector.broadcast %147 : vector<32x1xf32> to vector<32x128xf32>
      %150 = arith.addf %149, %148 : vector<32x128xf32>
      %cst_56 = arith.constant 0.000000e+00 : f32
      %151 = vector.broadcast %cst_56 : f32 to vector<32x128xf32>
      %152 = arith.maximumf %150, %151 : vector<32x128xf32>
      %153 = vector.extract_strided_slice %3 {offsets = [96, 0], sizes = [32, 128], strides = [1, 1]} : vector<128x128xf32> to vector<32x128xf32>
      %154 = arith.mulf %152, %153 : vector<32x128xf32>
      %cst_57 = arith.constant dense<0.000000e+00> : vector<128xf32>
      %155 = vector.multi_reduction <add>, %154, %cst_57 [0] : vector<32x128xf32> to vector<128xf32>
      %156 = vector.shape_cast %155 : vector<128xf32> to vector<1x128xf32>
      %157 = arith.addf %146, %156 : vector<1x128xf32>
      %158 = vector.broadcast %0 : f32 to vector<1x128xf32>
      %159 = arith.addf %157, %158 : vector<1x128xf32>
      %c8_i32_58 = arith.constant 8 : i32
      %160 = arith.muli %arg7, %c8_i32_58 : i32
      %c2_i32 = arith.constant 2 : i32
      %161 = arith.addi %160, %c2_i32 : i32
      %162 = arith.index_cast %161 : i32 to index
      %c0_59 = arith.constant 0 : index
      %163 = vector.load %arg6[%162, %c0_59] : memref<24x128xf32, #tpu.memory_space<vmem>>, vector<1x128xf32>
      tpu.vector_store %arg6[%162, %c0_59], %159 {strides = array<i32>} : memref<24x128xf32, #tpu.memory_space<vmem>>, vector<1x128xf32>,
      %164 = vector.extract_strided_slice %7 {offsets = [0, 3], sizes = [128, 1], strides = [1, 1]} : vector<128x8xf32> to vector<128x1xf32>
      %cst_60 = arith.constant 0.000000e+00 : f32
      %165 = vector.broadcast %cst_60 : f32 to vector<1x128xf32>
      %166 = vector.extract_strided_slice %164 {offsets = [0, 0], sizes = [32, 1], strides = [1, 1]} : vector<128x1xf32> to vector<32x1xf32>
      %c0_61 = arith.constant 0 : index
      %c0_62 = arith.constant 0 : index
      %167 = vector.load %arg3[%c0_61, %c0_62] : memref<128x128xf32, #tpu.memory_space<vmem>>, vector<32x128xf32>
      %168 = vector.broadcast %166 : vector<32x1xf32> to vector<32x128xf32>
      %169 = arith.addf %168, %167 : vector<32x128xf32>
      %cst_63 = arith.constant 0.000000e+00 : f32
      %170 = vector.broadcast %cst_63 : f32 to vector<32x128xf32>
      %171 = arith.maximumf %169, %170 : vector<32x128xf32>
      %172 = vector.extract_strided_slice %3 {offsets = [0, 0], sizes = [32, 128], strides = [1, 1]} : vector<128x128xf32> to vector<32x128xf32>
      %173 = arith.mulf %171, %172 : vector<32x128xf32>
      %cst_64 = arith.constant dense<0.000000e+00> : vector<128xf32>
      %174 = vector.multi_reduction <add>, %173, %cst_64 [0] : vector<32x128xf32> to vector<128xf32>
      %175 = vector.shape_cast %174 : vector<128xf32> to vector<1x128xf32>
      %176 = arith.addf %165, %175 : vector<1x128xf32>
      %177 = vector.extract_strided_slice %164 {offsets = [32, 0], sizes = [32, 1], strides = [1, 1]} : vector<128x1xf32> to vector<32x1xf32>
      %c32_65 = arith.constant 32 : index
      %c0_66 = arith.constant 0 : index
      %178 = vector.load %arg3[%c32_65, %c0_66] : memref<128x128xf32, #tpu.memory_space<vmem>>, vector<32x128xf32>
      %179 = vector.broadcast %177 : vector<32x1xf32> to vector<32x128xf32>
      %180 = arith.addf %179, %178 : vector<32x128xf32>
      %cst_67 = arith.constant 0.000000e+00 : f32
      %181 = vector.broadcast %cst_67 : f32 to vector<32x128xf32>
      %182 = arith.maximumf %180, %181 : vector<32x128xf32>
      %183 = vector.extract_strided_slice %3 {offsets = [32, 0], sizes = [32, 128], strides = [1, 1]} : vector<128x128xf32> to vector<32x128xf32>
      %184 = arith.mulf %182, %183 : vector<32x128xf32>
      %cst_68 = arith.constant dense<0.000000e+00> : vector<128xf32>
      %185 = vector.multi_reduction <add>, %184, %cst_68 [0] : vector<32x128xf32> to vector<128xf32>
      %186 = vector.shape_cast %185 : vector<128xf32> to vector<1x128xf32>
      %187 = arith.addf %176, %186 : vector<1x128xf32>
      %188 = vector.extract_strided_slice %164 {offsets = [64, 0], sizes = [32, 1], strides = [1, 1]} : vector<128x1xf32> to vector<32x1xf32>
      %c64_69 = arith.constant 64 : index
      %c0_70 = arith.constant 0 : index
      %189 = vector.load %arg3[%c64_69, %c0_70] : memref<128x128xf32, #tpu.memory_space<vmem>>, vector<32x128xf32>
      %190 = vector.broadcast %188 : vector<32x1xf32> to vector<32x128xf32>
      %191 = arith.addf %190, %189 : vector<32x128xf32>
      %cst_71 = arith.constant 0.000000e+00 : f32
      %192 = vector.broadcast %cst_71 : f32 to vector<32x128xf32>
      %193 = arith.maximumf %191, %192 : vector<32x128xf32>
      %194 = vector.extract_strided_slice %3 {offsets = [64, 0], sizes = [32, 128], strides = [1, 1]} : vector<128x128xf32> to vector<32x128xf32>
      %195 = arith.mulf %193, %194 : vector<32x128xf32>
      %cst_72 = arith.constant dense<0.000000e+00> : vector<128xf32>
      %196 = vector.multi_reduction <add>, %195, %cst_72 [0] : vector<32x128xf32> to vector<128xf32>
      %197 = vector.shape_cast %196 : vector<128xf32> to vector<1x128xf32>
      %198 = arith.addf %187, %197 : vector<1x128xf32>
      %199 = vector.extract_strided_slice %164 {offsets = [96, 0], sizes = [32, 1], strides = [1, 1]} : vector<128x1xf32> to vector<32x1xf32>
      %c96_73 = arith.constant 96 : index
      %c0_74 = arith.constant 0 : index
      %200 = vector.load %arg3[%c96_73, %c0_74] : memref<128x128xf32, #tpu.memory_space<vmem>>, vector<32x128xf32>
      %201 = vector.broadcast %199 : vector<32x1xf32> to vector<32x128xf32>
      %202 = arith.addf %201, %200 : vector<32x128xf32>
      %cst_75 = arith.constant 0.000000e+00 : f32
      %203 = vector.broadcast %cst_75 : f32 to vector<32x128xf32>
      %204 = arith.maximumf %202, %203 : vector<32x128xf32>
      %205 = vector.extract_strided_slice %3 {offsets = [96, 0], sizes = [32, 128], strides = [1, 1]} : vector<128x128xf32> to vector<32x128xf32>
      %206 = arith.mulf %204, %205 : vector<32x128xf32>
      %cst_76 = arith.constant dense<0.000000e+00> : vector<128xf32>
      %207 = vector.multi_reduction <add>, %206, %cst_76 [0] : vector<32x128xf32> to vector<128xf32>
      %208 = vector.shape_cast %207 : vector<128xf32> to vector<1x128xf32>
      %209 = arith.addf %198, %208 : vector<1x128xf32>
      %210 = vector.broadcast %0 : f32 to vector<1x128xf32>
      %211 = arith.addf %209, %210 : vector<1x128xf32>
      %c8_i32_77 = arith.constant 8 : i32
      %212 = arith.muli %arg7, %c8_i32_77 : i32
      %c3_i32_78 = arith.constant 3 : i32
      %213 = arith.addi %212, %c3_i32_78 : i32
      %214 = arith.index_cast %213 : i32 to index
      %c0_79 = arith.constant 0 : index
      %215 = vector.load %arg6[%214, %c0_79] : memref<24x128xf32, #tpu.memory_space<vmem>>, vector<1x128xf32>
      tpu.vector_store %arg6[%214, %c0_79], %211 {strides = array<i32>} : memref<24x128xf32, #tpu.memory_space<vmem>>, vector<1x128xf32>,
      %216 = vector.extract_strided_slice %7 {offsets = [0, 4], sizes = [128, 1], strides = [1, 1]} : vector<128x8xf32> to vector<128x1xf32>
      %cst_80 = arith.constant 0.000000e+00 : f32
      %217 = vector.broadcast %cst_80 : f32 to vector<1x128xf32>
      %218 = vector.extract_strided_slice %216 {offsets = [0, 0], sizes = [32, 1], strides = [1, 1]} : vector<128x1xf32> to vector<32x1xf32>
      %c0_81 = arith.constant 0 : index
      %c0_82 = arith.constant 0 : index
      %219 = vector.load %arg3[%c0_81, %c0_82] : memref<128x128xf32, #tpu.memory_space<vmem>>, vector<32x128xf32>
      %220 = vector.broadcast %218 : vector<32x1xf32> to vector<32x128xf32>
      %221 = arith.addf %220, %219 : vector<32x128xf32>
      %cst_83 = arith.constant 0.000000e+00 : f32
      %222 = vector.broadcast %cst_83 : f32 to vector<32x128xf32>
      %223 = arith.maximumf %221, %222 : vector<32x128xf32>
      %224 = vector.extract_strided_slice %3 {offsets = [0, 0], sizes = [32, 128], strides = [1, 1]} : vector<128x128xf32> to vector<32x128xf32>
      %225 = arith.mulf %223, %224 : vector<32x128xf32>
      %cst_84 = arith.constant dense<0.000000e+00> : vector<128xf32>
      %226 = vector.multi_reduction <add>, %225, %cst_84 [0] : vector<32x128xf32> to vector<128xf32>
      %227 = vector.shape_cast %226 : vector<128xf32> to vector<1x128xf32>
      %228 = arith.addf %217, %227 : vector<1x128xf32>
      %229 = vector.extract_strided_slice %216 {offsets = [32, 0], sizes = [32, 1], strides = [1, 1]} : vector<128x1xf32> to vector<32x1xf32>
      %c32_85 = arith.constant 32 : index
      %c0_86 = arith.constant 0 : index
      %230 = vector.load %arg3[%c32_85, %c0_86] : memref<128x128xf32, #tpu.memory_space<vmem>>, vector<32x128xf32>
      %231 = vector.broadcast %229 : vector<32x1xf32> to vector<32x128xf32>
      %232 = arith.addf %231, %230 : vector<32x128xf32>
      %cst_87 = arith.constant 0.000000e+00 : f32
      %233 = vector.broadcast %cst_87 : f32 to vector<32x128xf32>
      %234 = arith.maximumf %232, %233 : vector<32x128xf32>
      %235 = vector.extract_strided_slice %3 {offsets = [32, 0], sizes = [32, 128], strides = [1, 1]} : vector<128x128xf32> to vector<32x128xf32>
      %236 = arith.mulf %234, %235 : vector<32x128xf32>
      %cst_88 = arith.constant dense<0.000000e+00> : vector<128xf32>
      %237 = vector.multi_reduction <add>, %236, %cst_88 [0] : vector<32x128xf32> to vector<128xf32>
      %238 = vector.shape_cast %237 : vector<128xf32> to vector<1x128xf32>
      %239 = arith.addf %228, %238 : vector<1x128xf32>
      %240 = vector.extract_strided_slice %216 {offsets = [64, 0], sizes = [32, 1], strides = [1, 1]} : vector<128x1xf32> to vector<32x1xf32>
      %c64_89 = arith.constant 64 : index
      %c0_90 = arith.constant 0 : index
      %241 = vector.load %arg3[%c64_89, %c0_90] : memref<128x128xf32, #tpu.memory_space<vmem>>, vector<32x128xf32>
      %242 = vector.broadcast %240 : vector<32x1xf32> to vector<32x128xf32>
      %243 = arith.addf %242, %241 : vector<32x128xf32>
      %cst_91 = arith.constant 0.000000e+00 : f32
      %244 = vector.broadcast %cst_91 : f32 to vector<32x128xf32>
      %245 = arith.maximumf %243, %244 : vector<32x128xf32>
      %246 = vector.extract_strided_slice %3 {offsets = [64, 0], sizes = [32, 128], strides = [1, 1]} : vector<128x128xf32> to vector<32x128xf32>
      %247 = arith.mulf %245, %246 : vector<32x128xf32>
      %cst_92 = arith.constant dense<0.000000e+00> : vector<128xf32>
      %248 = vector.multi_reduction <add>, %247, %cst_92 [0] : vector<32x128xf32> to vector<128xf32>
      %249 = vector.shape_cast %248 : vector<128xf32> to vector<1x128xf32>
      %250 = arith.addf %239, %249 : vector<1x128xf32>
      %251 = vector.extract_strided_slice %216 {offsets = [96, 0], sizes = [32, 1], strides = [1, 1]} : vector<128x1xf32> to vector<32x1xf32>
      %c96_93 = arith.constant 96 : index
      %c0_94 = arith.constant 0 : index
      %252 = vector.load %arg3[%c96_93, %c0_94] : memref<128x128xf32, #tpu.memory_space<vmem>>, vector<32x128xf32>
      %253 = vector.broadcast %251 : vector<32x1xf32> to vector<32x128xf32>
      %254 = arith.addf %253, %252 : vector<32x128xf32>
      %cst_95 = arith.constant 0.000000e+00 : f32
      %255 = vector.broadcast %cst_95 : f32 to vector<32x128xf32>
      %256 = arith.maximumf %254, %255 : vector<32x128xf32>
      %257 = vector.extract_strided_slice %3 {offsets = [96, 0], sizes = [32, 128], strides = [1, 1]} : vector<128x128xf32> to vector<32x128xf32>
      %258 = arith.mulf %256, %257 : vector<32x128xf32>
      %cst_96 = arith.constant dense<0.000000e+00> : vector<128xf32>
      %259 = vector.multi_reduction <add>, %258, %cst_96 [0] : vector<32x128xf32> to vector<128xf32>
      %260 = vector.shape_cast %259 : vector<128xf32> to vector<1x128xf32>
      %261 = arith.addf %250, %260 : vector<1x128xf32>
      %262 = vector.broadcast %0 : f32 to vector<1x128xf32>
      %263 = arith.addf %261, %262 : vector<1x128xf32>
      %c8_i32_97 = arith.constant 8 : i32
      %264 = arith.muli %arg7, %c8_i32_97 : i32
      %c4_i32 = arith.constant 4 : i32
      %265 = arith.addi %264, %c4_i32 : i32
      %266 = arith.index_cast %265 : i32 to index
      %c0_98 = arith.constant 0 : index
      %267 = vector.load %arg6[%266, %c0_98] : memref<24x128xf32, #tpu.memory_space<vmem>>, vector<1x128xf32>
      tpu.vector_store %arg6[%266, %c0_98], %263 {strides = array<i32>} : memref<24x128xf32, #tpu.memory_space<vmem>>, vector<1x128xf32>,
      %268 = vector.extract_strided_slice %7 {offsets = [0, 5], sizes = [128, 1], strides = [1, 1]} : vector<128x8xf32> to vector<128x1xf32>
      %cst_99 = arith.constant 0.000000e+00 : f32
      %269 = vector.broadcast %cst_99 : f32 to vector<1x128xf32>
      %270 = vector.extract_strided_slice %268 {offsets = [0, 0], sizes = [32, 1], strides = [1, 1]} : vector<128x1xf32> to vector<32x1xf32>
      %c0_100 = arith.constant 0 : index
      %c0_101 = arith.constant 0 : index
      %271 = vector.load %arg3[%c0_100, %c0_101] : memref<128x128xf32, #tpu.memory_space<vmem>>, vector<32x128xf32>
      %272 = vector.broadcast %270 : vector<32x1xf32> to vector<32x128xf32>
      %273 = arith.addf %272, %271 : vector<32x128xf32>
      %cst_102 = arith.constant 0.000000e+00 : f32
      %274 = vector.broadcast %cst_102 : f32 to vector<32x128xf32>
      %275 = arith.maximumf %273, %274 : vector<32x128xf32>
      %276 = vector.extract_strided_slice %3 {offsets = [0, 0], sizes = [32, 128], strides = [1, 1]} : vector<128x128xf32> to vector<32x128xf32>
      %277 = arith.mulf %275, %276 : vector<32x128xf32>
      %cst_103 = arith.constant dense<0.000000e+00> : vector<128xf32>
      %278 = vector.multi_reduction <add>, %277, %cst_103 [0] : vector<32x128xf32> to vector<128xf32>
      %279 = vector.shape_cast %278 : vector<128xf32> to vector<1x128xf32>
      %280 = arith.addf %269, %279 : vector<1x128xf32>
      %281 = vector.extract_strided_slice %268 {offsets = [32, 0], sizes = [32, 1], strides = [1, 1]} : vector<128x1xf32> to vector<32x1xf32>
      %c32_104 = arith.constant 32 : index
      %c0_105 = arith.constant 0 : index
      %282 = vector.load %arg3[%c32_104, %c0_105] : memref<128x128xf32, #tpu.memory_space<vmem>>, vector<32x128xf32>
      %283 = vector.broadcast %281 : vector<32x1xf32> to vector<32x128xf32>
      %284 = arith.addf %283, %282 : vector<32x128xf32>
      %cst_106 = arith.constant 0.000000e+00 : f32
      %285 = vector.broadcast %cst_106 : f32 to vector<32x128xf32>
      %286 = arith.maximumf %284, %285 : vector<32x128xf32>
      %287 = vector.extract_strided_slice %3 {offsets = [32, 0], sizes = [32, 128], strides = [1, 1]} : vector<128x128xf32> to vector<32x128xf32>
      %288 = arith.mulf %286, %287 : vector<32x128xf32>
      %cst_107 = arith.constant dense<0.000000e+00> : vector<128xf32>
      %289 = vector.multi_reduction <add>, %288, %cst_107 [0] : vector<32x128xf32> to vector<128xf32>
      %290 = vector.shape_cast %289 : vector<128xf32> to vector<1x128xf32>
      %291 = arith.addf %280, %290 : vector<1x128xf32>
      %292 = vector.extract_strided_slice %268 {offsets = [64, 0], sizes = [32, 1], strides = [1, 1]} : vector<128x1xf32> to vector<32x1xf32>
      %c64_108 = arith.constant 64 : index
      %c0_109 = arith.constant 0 : index
      %293 = vector.load %arg3[%c64_108, %c0_109] : memref<128x128xf32, #tpu.memory_space<vmem>>, vector<32x128xf32>
      %294 = vector.broadcast %292 : vector<32x1xf32> to vector<32x128xf32>
      %295 = arith.addf %294, %293 : vector<32x128xf32>
      %cst_110 = arith.constant 0.000000e+00 : f32
      %296 = vector.broadcast %cst_110 : f32 to vector<32x128xf32>
      %297 = arith.maximumf %295, %296 : vector<32x128xf32>
      %298 = vector.extract_strided_slice %3 {offsets = [64, 0], sizes = [32, 128], strides = [1, 1]} : vector<128x128xf32> to vector<32x128xf32>
      %299 = arith.mulf %297, %298 : vector<32x128xf32>
      %cst_111 = arith.constant dense<0.000000e+00> : vector<128xf32>
      %300 = vector.multi_reduction <add>, %299, %cst_111 [0] : vector<32x128xf32> to vector<128xf32>
      %301 = vector.shape_cast %300 : vector<128xf32> to vector<1x128xf32>
      %302 = arith.addf %291, %301 : vector<1x128xf32>
      %303 = vector.extract_strided_slice %268 {offsets = [96, 0], sizes = [32, 1], strides = [1, 1]} : vector<128x1xf32> to vector<32x1xf32>
      %c96_112 = arith.constant 96 : index
      %c0_113 = arith.constant 0 : index
      %304 = vector.load %arg3[%c96_112, %c0_113] : memref<128x128xf32, #tpu.memory_space<vmem>>, vector<32x128xf32>
      %305 = vector.broadcast %303 : vector<32x1xf32> to vector<32x128xf32>
      %306 = arith.addf %305, %304 : vector<32x128xf32>
      %cst_114 = arith.constant 0.000000e+00 : f32
      %307 = vector.broadcast %cst_114 : f32 to vector<32x128xf32>
      %308 = arith.maximumf %306, %307 : vector<32x128xf32>
      %309 = vector.extract_strided_slice %3 {offsets = [96, 0], sizes = [32, 128], strides = [1, 1]} : vector<128x128xf32> to vector<32x128xf32>
      %310 = arith.mulf %308, %309 : vector<32x128xf32>
      %cst_115 = arith.constant dense<0.000000e+00> : vector<128xf32>
      %311 = vector.multi_reduction <add>, %310, %cst_115 [0] : vector<32x128xf32> to vector<128xf32>
      %312 = vector.shape_cast %311 : vector<128xf32> to vector<1x128xf32>
      %313 = arith.addf %302, %312 : vector<1x128xf32>
      %314 = vector.broadcast %0 : f32 to vector<1x128xf32>
      %315 = arith.addf %313, %314 : vector<1x128xf32>
      %c8_i32_116 = arith.constant 8 : i32
      %316 = arith.muli %arg7, %c8_i32_116 : i32
      %c5_i32 = arith.constant 5 : i32
      %317 = arith.addi %316, %c5_i32 : i32
      %318 = arith.index_cast %317 : i32 to index
      %c0_117 = arith.constant 0 : index
      %319 = vector.load %arg6[%318, %c0_117] : memref<24x128xf32, #tpu.memory_space<vmem>>, vector<1x128xf32>
      tpu.vector_store %arg6[%318, %c0_117], %315 {strides = array<i32>} : memref<24x128xf32, #tpu.memory_space<vmem>>, vector<1x128xf32>,
      %320 = vector.extract_strided_slice %7 {offsets = [0, 6], sizes = [128, 1], strides = [1, 1]} : vector<128x8xf32> to vector<128x1xf32>
      %cst_118 = arith.constant 0.000000e+00 : f32
      %321 = vector.broadcast %cst_118 : f32 to vector<1x128xf32>
      %322 = vector.extract_strided_slice %320 {offsets = [0, 0], sizes = [32, 1], strides = [1, 1]} : vector<128x1xf32> to vector<32x1xf32>
      %c0_119 = arith.constant 0 : index
      %c0_120 = arith.constant 0 : index
      %323 = vector.load %arg3[%c0_119, %c0_120] : memref<128x128xf32, #tpu.memory_space<vmem>>, vector<32x128xf32>
      %324 = vector.broadcast %322 : vector<32x1xf32> to vector<32x128xf32>
      %325 = arith.addf %324, %323 : vector<32x128xf32>
      %cst_121 = arith.constant 0.000000e+00 : f32
      %326 = vector.broadcast %cst_121 : f32 to vector<32x128xf32>
      %327 = arith.maximumf %325, %326 : vector<32x128xf32>
      %328 = vector.extract_strided_slice %3 {offsets = [0, 0], sizes = [32, 128], strides = [1, 1]} : vector<128x128xf32> to vector<32x128xf32>
      %329 = arith.mulf %327, %328 : vector<32x128xf32>
      %cst_122 = arith.constant dense<0.000000e+00> : vector<128xf32>
      %330 = vector.multi_reduction <add>, %329, %cst_122 [0] : vector<32x128xf32> to vector<128xf32>
      %331 = vector.shape_cast %330 : vector<128xf32> to vector<1x128xf32>
      %332 = arith.addf %321, %331 : vector<1x128xf32>
      %333 = vector.extract_strided_slice %320 {offsets = [32, 0], sizes = [32, 1], strides = [1, 1]} : vector<128x1xf32> to vector<32x1xf32>
      %c32_123 = arith.constant 32 : index
      %c0_124 = arith.constant 0 : index
      %334 = vector.load %arg3[%c32_123, %c0_124] : memref<128x128xf32, #tpu.memory_space<vmem>>, vector<32x128xf32>
      %335 = vector.broadcast %333 : vector<32x1xf32> to vector<32x128xf32>
      %336 = arith.addf %335, %334 : vector<32x128xf32>
      %cst_125 = arith.constant 0.000000e+00 : f32
      %337 = vector.broadcast %cst_125 : f32 to vector<32x128xf32>
      %338 = arith.maximumf %336, %337 : vector<32x128xf32>
      %339 = vector.extract_strided_slice %3 {offsets = [32, 0], sizes = [32, 128], strides = [1, 1]} : vector<128x128xf32> to vector<32x128xf32>
      %340 = arith.mulf %338, %339 : vector<32x128xf32>
      %cst_126 = arith.constant dense<0.000000e+00> : vector<128xf32>
      %341 = vector.multi_reduction <add>, %340, %cst_126 [0] : vector<32x128xf32> to vector<128xf32>
      %342 = vector.shape_cast %341 : vector<128xf32> to vector<1x128xf32>
      %343 = arith.addf %332, %342 : vector<1x128xf32>
      %344 = vector.extract_strided_slice %320 {offsets = [64, 0], sizes = [32, 1], strides = [1, 1]} : vector<128x1xf32> to vector<32x1xf32>
      %c64_127 = arith.constant 64 : index
      %c0_128 = arith.constant 0 : index
      %345 = vector.load %arg3[%c64_127, %c0_128] : memref<128x128xf32, #tpu.memory_space<vmem>>, vector<32x128xf32>
      %346 = vector.broadcast %344 : vector<32x1xf32> to vector<32x128xf32>
      %347 = arith.addf %346, %345 : vector<32x128xf32>
      %cst_129 = arith.constant 0.000000e+00 : f32
      %348 = vector.broadcast %cst_129 : f32 to vector<32x128xf32>
      %349 = arith.maximumf %347, %348 : vector<32x128xf32>
      %350 = vector.extract_strided_slice %3 {offsets = [64, 0], sizes = [32, 128], strides = [1, 1]} : vector<128x128xf32> to vector<32x128xf32>
      %351 = arith.mulf %349, %350 : vector<32x128xf32>
      %cst_130 = arith.constant dense<0.000000e+00> : vector<128xf32>
      %352 = vector.multi_reduction <add>, %351, %cst_130 [0] : vector<32x128xf32> to vector<128xf32>
      %353 = vector.shape_cast %352 : vector<128xf32> to vector<1x128xf32>
      %354 = arith.addf %343, %353 : vector<1x128xf32>
      %355 = vector.extract_strided_slice %320 {offsets = [96, 0], sizes = [32, 1], strides = [1, 1]} : vector<128x1xf32> to vector<32x1xf32>
      %c96_131 = arith.constant 96 : index
      %c0_132 = arith.constant 0 : index
      %356 = vector.load %arg3[%c96_131, %c0_132] : memref<128x128xf32, #tpu.memory_space<vmem>>, vector<32x128xf32>
      %357 = vector.broadcast %355 : vector<32x1xf32> to vector<32x128xf32>
      %358 = arith.addf %357, %356 : vector<32x128xf32>
      %cst_133 = arith.constant 0.000000e+00 : f32
      %359 = vector.broadcast %cst_133 : f32 to vector<32x128xf32>
      %360 = arith.maximumf %358, %359 : vector<32x128xf32>
      %361 = vector.extract_strided_slice %3 {offsets = [96, 0], sizes = [32, 128], strides = [1, 1]} : vector<128x128xf32> to vector<32x128xf32>
      %362 = arith.mulf %360, %361 : vector<32x128xf32>
      %cst_134 = arith.constant dense<0.000000e+00> : vector<128xf32>
      %363 = vector.multi_reduction <add>, %362, %cst_134 [0] : vector<32x128xf32> to vector<128xf32>
      %364 = vector.shape_cast %363 : vector<128xf32> to vector<1x128xf32>
      %365 = arith.addf %354, %364 : vector<1x128xf32>
      %366 = vector.broadcast %0 : f32 to vector<1x128xf32>
      %367 = arith.addf %365, %366 : vector<1x128xf32>
      %c8_i32_135 = arith.constant 8 : i32
      %368 = arith.muli %arg7, %c8_i32_135 : i32
      %c6_i32 = arith.constant 6 : i32
      %369 = arith.addi %368, %c6_i32 : i32
      %370 = arith.index_cast %369 : i32 to index
      %c0_136 = arith.constant 0 : index
      %371 = vector.load %arg6[%370, %c0_136] : memref<24x128xf32, #tpu.memory_space<vmem>>, vector<1x128xf32>
      tpu.vector_store %arg6[%370, %c0_136], %367 {strides = array<i32>} : memref<24x128xf32, #tpu.memory_space<vmem>>, vector<1x128xf32>,
      %372 = vector.extract_strided_slice %7 {offsets = [0, 7], sizes = [128, 1], strides = [1, 1]} : vector<128x8xf32> to vector<128x1xf32>
      %cst_137 = arith.constant 0.000000e+00 : f32
      %373 = vector.broadcast %cst_137 : f32 to vector<1x128xf32>
      %374 = vector.extract_strided_slice %372 {offsets = [0, 0], sizes = [32, 1], strides = [1, 1]} : vector<128x1xf32> to vector<32x1xf32>
      %c0_138 = arith.constant 0 : index
      %c0_139 = arith.constant 0 : index
      %375 = vector.load %arg3[%c0_138, %c0_139] : memref<128x128xf32, #tpu.memory_space<vmem>>, vector<32x128xf32>
      %376 = vector.broadcast %374 : vector<32x1xf32> to vector<32x128xf32>
      %377 = arith.addf %376, %375 : vector<32x128xf32>
      %cst_140 = arith.constant 0.000000e+00 : f32
      %378 = vector.broadcast %cst_140 : f32 to vector<32x128xf32>
      %379 = arith.maximumf %377, %378 : vector<32x128xf32>
      %380 = vector.extract_strided_slice %3 {offsets = [0, 0], sizes = [32, 128], strides = [1, 1]} : vector<128x128xf32> to vector<32x128xf32>
      %381 = arith.mulf %379, %380 : vector<32x128xf32>
      %cst_141 = arith.constant dense<0.000000e+00> : vector<128xf32>
      %382 = vector.multi_reduction <add>, %381, %cst_141 [0] : vector<32x128xf32> to vector<128xf32>
      %383 = vector.shape_cast %382 : vector<128xf32> to vector<1x128xf32>
      %384 = arith.addf %373, %383 : vector<1x128xf32>
      %385 = vector.extract_strided_slice %372 {offsets = [32, 0], sizes = [32, 1], strides = [1, 1]} : vector<128x1xf32> to vector<32x1xf32>
      %c32_142 = arith.constant 32 : index
      %c0_143 = arith.constant 0 : index
      %386 = vector.load %arg3[%c32_142, %c0_143] : memref<128x128xf32, #tpu.memory_space<vmem>>, vector<32x128xf32>
      %387 = vector.broadcast %385 : vector<32x1xf32> to vector<32x128xf32>
      %388 = arith.addf %387, %386 : vector<32x128xf32>
      %cst_144 = arith.constant 0.000000e+00 : f32
      %389 = vector.broadcast %cst_144 : f32 to vector<32x128xf32>
      %390 = arith.maximumf %388, %389 : vector<32x128xf32>
      %391 = vector.extract_strided_slice %3 {offsets = [32, 0], sizes = [32, 128], strides = [1, 1]} : vector<128x128xf32> to vector<32x128xf32>
      %392 = arith.mulf %390, %391 : vector<32x128xf32>
      %cst_145 = arith.constant dense<0.000000e+00> : vector<128xf32>
      %393 = vector.multi_reduction <add>, %392, %cst_145 [0] : vector<32x128xf32> to vector<128xf32>
      %394 = vector.shape_cast %393 : vector<128xf32> to vector<1x128xf32>
      %395 = arith.addf %384, %394 : vector<1x128xf32>
      %396 = vector.extract_strided_slice %372 {offsets = [64, 0], sizes = [32, 1], strides = [1, 1]} : vector<128x1xf32> to vector<32x1xf32>
      %c64_146 = arith.constant 64 : index
      %c0_147 = arith.constant 0 : index
      %397 = vector.load %arg3[%c64_146, %c0_147] : memref<128x128xf32, #tpu.memory_space<vmem>>, vector<32x128xf32>
      %398 = vector.broadcast %396 : vector<32x1xf32> to vector<32x128xf32>
      %399 = arith.addf %398, %397 : vector<32x128xf32>
      %cst_148 = arith.constant 0.000000e+00 : f32
      %400 = vector.broadcast %cst_148 : f32 to vector<32x128xf32>
      %401 = arith.maximumf %399, %400 : vector<32x128xf32>
      %402 = vector.extract_strided_slice %3 {offsets = [64, 0], sizes = [32, 128], strides = [1, 1]} : vector<128x128xf32> to vector<32x128xf32>
      %403 = arith.mulf %401, %402 : vector<32x128xf32>
      %cst_149 = arith.constant dense<0.000000e+00> : vector<128xf32>
      %404 = vector.multi_reduction <add>, %403, %cst_149 [0] : vector<32x128xf32> to vector<128xf32>
      %405 = vector.shape_cast %404 : vector<128xf32> to vector<1x128xf32>
      %406 = arith.addf %395, %405 : vector<1x128xf32>
      %407 = vector.extract_strided_slice %372 {offsets = [96, 0], sizes = [32, 1], strides = [1, 1]} : vector<128x1xf32> to vector<32x1xf32>
      %c96_150 = arith.constant 96 : index
      %c0_151 = arith.constant 0 : index
      %408 = vector.load %arg3[%c96_150, %c0_151] : memref<128x128xf32, #tpu.memory_space<vmem>>, vector<32x128xf32>
      %409 = vector.broadcast %407 : vector<32x1xf32> to vector<32x128xf32>
      %410 = arith.addf %409, %408 : vector<32x128xf32>
      %cst_152 = arith.constant 0.000000e+00 : f32
      %411 = vector.broadcast %cst_152 : f32 to vector<32x128xf32>
      %412 = arith.maximumf %410, %411 : vector<32x128xf32>
      %413 = vector.extract_strided_slice %3 {offsets = [96, 0], sizes = [32, 128], strides = [1, 1]} : vector<128x128xf32> to vector<32x128xf32>
      %414 = arith.mulf %412, %413 : vector<32x128xf32>
      %cst_153 = arith.constant dense<0.000000e+00> : vector<128xf32>
      %415 = vector.multi_reduction <add>, %414, %cst_153 [0] : vector<32x128xf32> to vector<128xf32>
      %416 = vector.shape_cast %415 : vector<128xf32> to vector<1x128xf32>
      %417 = arith.addf %406, %416 : vector<1x128xf32>
      %418 = vector.broadcast %0 : f32 to vector<1x128xf32>
      %419 = arith.addf %417, %418 : vector<1x128xf32>
      %c8_i32_154 = arith.constant 8 : i32
      %420 = arith.muli %arg7, %c8_i32_154 : i32
      %c7_i32 = arith.constant 7 : i32
      %421 = arith.addi %420, %c7_i32 : i32
      %422 = arith.index_cast %421 : i32 to index
      %c0_155 = arith.constant 0 : index
      %423 = vector.load %arg6[%422, %c0_155] : memref<24x128xf32, #tpu.memory_space<vmem>>, vector<1x128xf32>
      tpu.vector_store %arg6[%422, %c0_155], %419 {strides = array<i32>} : memref<24x128xf32, #tpu.memory_space<vmem>>, vector<1x128xf32>,
    }
    %c3_i32_3 = arith.constant 3 : i32
    return
  }
  func.func @transform_0(%arg0: i32, %arg1: i32) -> (i32, i32, i32) {
    %c0_i32 = arith.constant 0 : i32
    %c0_i32_0 = arith.constant 0 : i32
    %c0_i32_1 = arith.constant 0 : i32
    return %arg0, %c0_i32, %c0_i32_0 : i32, i32, i32
  }
  func.func @transform_1(%arg0: i32, %arg1: i32) -> (i32, i32) {
    %c0_i32 = arith.constant 0 : i32
    %c0_i32_0 = arith.constant 0 : i32
    return %c0_i32, %arg1 : i32, i32
  }
  func.func @transform_2(%arg0: i32, %arg1: i32) -> (i32, i32) {
    %c0_i32 = arith.constant 0 : i32
    %c0_i32_0 = arith.constant 0 : i32
    %c0_i32_1 = arith.constant 0 : i32
    return %c0_i32, %c0_i32_0 : i32, i32
  }
  func.func @transform_3(%arg0: i32, %arg1: i32) -> (i32, i32) {
    %c0_i32 = arith.constant 0 : i32
    %c0_i32_0 = arith.constant 0 : i32
    %c0_i32_1 = arith.constant 0 : i32
    return %c0_i32, %c0_i32_0 : i32, i32
  }
  func.func @transform_4(%arg0: i32, %arg1: i32) -> (i32, i32) {
    %c0_i32 = arith.constant 0 : i32
    return %arg0, %arg1 : i32, i32
  }
}

</mosaic_0001>

<llo_original>
// kernel: tpu_custom_call.1
$region0: #{tpu_custom_call.1}
  #allocation0 [shape = 'u32[]', space=smem, size = 0x4, offset = 0x4, fixed_abs, tag = 'smem constant byte address 0x4 - core index']
  #allocation1 [shape = 'u32[72,128]{1,0:T(1,128)}', space=vmem, size = 0x9000, scoped, tag = 'internal scratch']
  #allocation2 [shape = 'f32[1,1]{1,0:T(1,128)S(6)}', space=smem, size = 0x200, scoped, tag = 'scoped memory for tpu_custom_call.1']
  %s0 = inlined_call_operand.vmem [shape: f32[3,128,8], index: 0, kind: input, shape index: {}]
  %s1 = inlined_call_operand.vmem [shape: f32[128,128], index: 1, kind: input, shape index: {}]
  %s2 = inlined_call_operand.vmem [shape: f32[128,1], index: 2, kind: input, shape index: {}]
  %s3 = inlined_call_operand.<no memory space> [shape: f32[1,1], index: 3, kind: input, shape index: {}]
  %s4 = inlined_call_operand.hbm [shape: f32[24,128], index: 4, kind: output, shape index: {}]
  %s5 = sld [smem:[#allocation0]]
  $region33: #{tpu_custom_call.1} parent=0
    _
  %s7 = ssub.s32 1, %s5
  %s8 = scalar_select 0, %s7, %s5
  %9 = sst [smem:[#allocation2]] %s3
  $region1: #{tpu_custom_call.1} parent=0
    #allocation3 [shape = 'u8[12288]{0}', space=vmem, size = 0x3000, scoped, tag = 'output window, operand 0, single buffered']
    #allocation4 [shape = 's32[1]{0}', space=sflag, size = 0x4, scoped, tag = 'scoped memory for tpu_custom_call.1']
    %10 = vsyncpa [#allocation4], 0
    // Predicated region
    $region2: #{tpu_custom_call.1} parent=1 // pred_check
      _
    $region3: #{tpu_custom_call.1} parent=1 // pred_check_branch
      %12 = sbr.rel (0) target = $region5
    $region4: #{tpu_custom_call.1} parent=1 // pred_region
      _
    $region5: #{tpu_custom_call.1} parent=1 // pred_fallthru
      _
    // Predicated region
    $region6: #{tpu_custom_call.1} parent=1 // pred_check
      _
    $region7: #{tpu_custom_call.1} parent=1 // pred_check_branch
      %14 = sbr.rel (0) target = $region9
    $region8: #{tpu_custom_call.1} parent=1 // pred_region
      _
    $region9: #{tpu_custom_call.1} parent=1 // pred_fallthru
      _
    // Predicated region
    $region10: #{tpu_custom_call.1} parent=1 // pred_check
      _
    $region11: #{tpu_custom_call.1} parent=1 // pred_check_branch
      %16 = sbr.rel (0) target = $region13
    $region12: #{tpu_custom_call.1} parent=1 // pred_region
      _
    $region13: #{tpu_custom_call.1} parent=1 // pred_fallthru
      _
    // Predicated region
    $region14: #{tpu_custom_call.1} parent=1 // pred_check
      _
    $region15: #{tpu_custom_call.1} parent=1 // pred_check_branch
      %18 = sbr.rel (0) target = $region17
    $region16: #{tpu_custom_call.1} parent=1 // pred_region
      _
    $region17: #{tpu_custom_call.1} parent=1 // pred_fallthru
      _
    %s19 = sld [smem:[#allocation2]]
    %v20 = vld [vmem:[%s2] sm:$0xff]
    %v21 = vld [vmem:[%s2 + $0x8] sm:$0xff]
    %v22 = vld [vmem:[%s2 + $0x10] sm:$0xff]
    %v23 = vld [vmem:[%s2 + $0x18] sm:$0xff]
    %v24 = vld [vmem:[%s2 + $0x20] sm:$0xff]
    %v25 = vld [vmem:[%s2 + $0x28] sm:$0xff]
    %v26 = vld [vmem:[%s2 + $0x30] sm:$0xff]
    %v27 = vld [vmem:[%s2 + $0x38] sm:$0xff]
    %v28 = vld [vmem:[%s2 + $0x40] sm:$0xff]
    %v29 = vld [vmem:[%s2 + $0x48] sm:$0xff]
    %v30 = vld [vmem:[%s2 + $0x50] sm:$0xff]
    %v31 = vld [vmem:[%s2 + $0x58] sm:$0xff]
    %v32 = vld [vmem:[%s2 + $0x60] sm:$0xff]
    %v33 = vld [vmem:[%s2 + $0x68] sm:$0xff]
    %v34 = vld [vmem:[%s2 + $0x70] sm:$0xff]
    %v35 = vld [vmem:[%s2 + $0x78] sm:$0xff]
    loop: start=0, step=1, limit=3
    $region18: #{tpu_custom_call.1} parent=1 // loop_pre_header
      _
    $region19: #{tpu_custom_call.1} parent=1 // loop_header
      %s37 = sphi 0, %s41
      %p38 = scmp.ge.s32.totalorder %s37, 3
    $region20: #{tpu_custom_call.1} parent=1 // loop_header_branch
      %40 = sbr.rel (%p38) target = $region24
    $region21: #{tpu_custom_call.1} parent=1 // loop_body
      %s42 = smul.u32 %s37, 128
      %s43 = scalar_lea.vmem %s0, %s42
      %v44 = vld [vmem:[%s43] sm:$0xff]
      %v45 = vld [vmem:[%s43 + $0x8] sm:$0xff]
      %v46 = vld [vmem:[%s43 + $0x10] sm:$0xff]
      %v47 = vld [vmem:[%s43 + $0x18] sm:$0xff]
      %v48 = vld [vmem:[%s43 + $0x20] sm:$0xff]
      %v49 = vld [vmem:[%s43 + $0x28] sm:$0xff]
      %v50 = vld [vmem:[%s43 + $0x30] sm:$0xff]
      %v51 = vld [vmem:[%s43 + $0x38] sm:$0xff]
      %v52 = vld [vmem:[%s43 + $0x40] sm:$0xff]
      %v53 = vld [vmem:[%s43 + $0x48] sm:$0xff]
      %v54 = vld [vmem:[%s43 + $0x50] sm:$0xff]
      %v55 = vld [vmem:[%s43 + $0x58] sm:$0xff]
      %v56 = vld [vmem:[%s43 + $0x60] sm:$0xff]
      %v57 = vld [vmem:[%s43 + $0x68] sm:$0xff]
      %v58 = vld [vmem:[%s43 + $0x70] sm:$0xff]
      %v59 = vld [vmem:[%s43 + $0x78] sm:$0xff]
      %v60 = vld [vmem:[%s1] sm:$0xff]
      %v61 = vld [vmem:[%s1 + $0x8] sm:$0xff]
      %v62 = vld [vmem:[%s1 + $0x10] sm:$0xff]
      %v63 = vld [vmem:[%s1 + $0x18] sm:$0xff]
      %65 = vset.pattern.permute.xlu0 0
      %66 = vperm.xlu0 %65, %v44
      %v67 = vpop.permute.xlu0 %66
      %70 = vset.pattern.permute.xlu0 0
      %71 = vperm.xlu0 %70, %v45
      %v72 = vpop.permute.xlu0 %71
      %75 = vset.pattern.permute.xlu0 0
      %76 = vperm.xlu0 %75, %v46
      %v77 = vpop.permute.xlu0 %76
      %80 = vset.pattern.permute.xlu0 0
      %81 = vperm.xlu0 %80, %v47
      %v82 = vpop.permute.xlu0 %81
      %v84 = vadd.f32 %v67, %v60
      %v85 = vadd.f32 %v72, %v61
      %v86 = vadd.f32 %v77, %v62
      %v87 = vadd.f32 %v82, %v63
      %v88 = vmax.f32 %v84, 0.0
      %v89 = vmax.f32 %v85, 0.0
      %v90 = vmax.f32 %v86, 0.0
      %v91 = vmax.f32 %v87, 0.0
      %93 = vset.pattern.permute.xlu0 0
      %94 = vperm.xlu0 %93, %v20
      %v95 = vpop.permute.xlu0 %94
      %98 = vset.pattern.permute.xlu0 0
      %99 = vperm.xlu0 %98, %v21
      %v100 = vpop.permute.xlu0 %99
      %103 = vset.pattern.permute.xlu0 0
      %104 = vperm.xlu0 %103, %v22
      %v105 = vpop.permute.xlu0 %104
      %108 = vset.pattern.permute.xlu0 0
      %109 = vperm.xlu0 %108, %v23
      %v110 = vpop.permute.xlu0 %109
      %v112 = vmul.f32 %v88, %v95
      %v113 = vmul.f32 %v89, %v100
      %v114 = vmul.f32 %v90, %v105
      %v115 = vmul.f32 %v91, %v110
      %v116 = vadd.f32 %v112, %v113
      %v117 = vadd.f32 %v116, %v114
      %v118 = vadd.f32 %v117, %v115
      %v119 = vrot.slane %v118, 4
      %v120 = vadd.f32 %v118, %v119
      %v121 = vrot.slane %v120, 2
      %v122 = vadd.f32 %v120, %v121
      %v123 = vrot.slane %v122, 1
      %v124 = vadd.f32 %v122, %v123
      %v125 = vadd.f32 %v124, 0.0
      %v126 = vld [vmem:[%s1 + $0x20] sm:$0xff]
      %v127 = vld [vmem:[%s1 + $0x28] sm:$0xff]
      %v128 = vld [vmem:[%s1 + $0x30] sm:$0xff]
      %v129 = vld [vmem:[%s1 + $0x38] sm:$0xff]
      %131 = vset.pattern.permute.xlu0 0
      %132 = vperm.xlu0 %131, %v48
      %v133 = vpop.permute.xlu0 %132
      %136 = vset.pattern.permute.xlu0 0
      %137 = vperm.xlu0 %136, %v49
      %v138 = vpop.permute.xlu0 %137
      %141 = vset.pattern.permute.xlu0 0
      %142 = vperm.xlu0 %141, %v50
      %v143 = vpop.permute.xlu0 %142
      %146 = vset.pattern.permute.xlu0 0
      %147 = vperm.xlu0 %146, %v51
      %v148 = vpop.permute.xlu0 %147
      %v150 = vadd.f32 %v133, %v126
      %v151 = vadd.f32 %v138, %v127
      %v152 = vadd.f32 %v143, %v128
      %v153 = vadd.f32 %v148, %v129
      %v154 = vmax.f32 %v150, 0.0
      %v155 = vmax.f32 %v151, 0.0
      %v156 = vmax.f32 %v152, 0.0
      %v157 = vmax.f32 %v153, 0.0
      %159 = vset.pattern.permute.xlu0 0
      %160 = vperm.xlu0 %159, %v24
      %v161 = vpop.permute.xlu0 %160
      %164 = vset.pattern.permute.xlu0 0
      %165 = vperm.xlu0 %164, %v25
      %v166 = vpop.permute.xlu0 %165
      %169 = vset.pattern.permute.xlu0 0
      %170 = vperm.xlu0 %169, %v26
      %v171 = vpop.permute.xlu0 %170
      %174 = vset.pattern.permute.xlu0 0
      %175 = vperm.xlu0 %174, %v27
      %v176 = vpop.permute.xlu0 %175
      %v178 = vmul.f32 %v154, %v161
      %v179 = vmul.f32 %v155, %v166
      %v180 = vmul.f32 %v156, %v171
      %v181 = vmul.f32 %v157, %v176
      %v182 = vadd.f32 %v178, %v179
      %v183 = vadd.f32 %v182, %v180
      %v184 = vadd.f32 %v183, %v181
      %v185 = vrot.slane %v184, 4
      %v186 = vadd.f32 %v184, %v185
      %v187 = vrot.slane %v186, 2
      %v188 = vadd.f32 %v186, %v187
      %v189 = vrot.slane %v188, 1
      %v190 = vadd.f32 %v188, %v189
      %v191 = vadd.f32 %v125, %v190
      %v192 = vld [vmem:[%s1 + $0x40] sm:$0xff]
      %v193 = vld [vmem:[%s1 + $0x48] sm:$0xff]
      %v194 = vld [vmem:[%s1 + $0x50] sm:$0xff]
      %v195 = vld [vmem:[%s1 + $0x58] sm:$0xff]
      %197 = vset.pattern.permute.xlu0 0
      %198 = vperm.xlu0 %197, %v52
      %v199 = vpop.permute.xlu0 %198
      %202 = vset.pattern.permute.xlu0 0
      %203 = vperm.xlu0 %202, %v53
      %v204 = vpop.permute.xlu0 %203
      %207 = vset.pattern.permute.xlu0 0
      %208 = vperm.xlu0 %207, %v54
      %v209 = vpop.permute.xlu0 %208
      %212 = vset.pattern.permute.xlu0 0
      %213 = vperm.xlu0 %212, %v55
      %v214 = vpop.permute.xlu0 %213
      %v216 = vadd.f32 %v199, %v192
      %v217 = vadd.f32 %v204, %v193
      %v218 = vadd.f32 %v209, %v194
      %v219 = vadd.f32 %v214, %v195
      %v220 = vmax.f32 %v216, 0.0
      %v221 = vmax.f32 %v217, 0.0
      %v222 = vmax.f32 %v218, 0.0
      %v223 = vmax.f32 %v219, 0.0
      %225 = vset.pattern.permute.xlu0 0
      %226 = vperm.xlu0 %225, %v28
      %v227 = vpop.permute.xlu0 %226
      %230 = vset.pattern.permute.xlu0 0
      %231 = vperm.xlu0 %230, %v29
      %v232 = vpop.permute.xlu0 %231
      %235 = vset.pattern.permute.xlu0 0
      %236 = vperm.xlu0 %235, %v30
      %v237 = vpop.permute.xlu0 %236
      %240 = vset.pattern.permute.xlu0 0
      %241 = vperm.xlu0 %240, %v31
      %v242 = vpop.permute.xlu0 %241
      %v244 = vmul.f32 %v220, %v227
      %v245 = vmul.f32 %v221, %v232
      %v246 = vmul.f32 %v222, %v237
      %v247 = vmul.f32 %v223, %v242
      %v248 = vadd.f32 %v244, %v245
      %v249 = vadd.f32 %v248, %v246
      %v250 = vadd.f32 %v249, %v247
      %v251 = vrot.slane %v250, 4
      %v252 = vadd.f32 %v250, %v251
      %v253 = vrot.slane %v252, 2
      %v254 = vadd.f32 %v252, %v253
      %v255 = vrot.slane %v254, 1
      %v256 = vadd.f32 %v254, %v255
      %v257 = vadd.f32 %v191, %v256
      %v258 = vld [vmem:[%s1 + $0x60] sm:$0xff]
      %v259 = vld [vmem:[%s1 + $0x68] sm:$0xff]
      %v260 = vld [vmem:[%s1 + $0x70] sm:$0xff]
      %v261 = vld [vmem:[%s1 + $0x78] sm:$0xff]
      %263 = vset.pattern.permute.xlu0 0
      %264 = vperm.xlu0 %263, %v56
      %v265 = vpop.permute.xlu0 %264
      %268 = vset.pattern.permute.xlu0 0
      %269 = vperm.xlu0 %268, %v57
      %v270 = vpop.permute.xlu0 %269
      %273 = vset.pattern.permute.xlu0 0
      %274 = vperm.xlu0 %273, %v58
      %v275 = vpop.permute.xlu0 %274
      %278 = vset.pattern.permute.xlu0 0
      %279 = vperm.xlu0 %278, %v59
      %v280 = vpop.permute.xlu0 %279
      %v282 = vadd.f32 %v265, %v258
      %v283 = vadd.f32 %v270, %v259
      %v284 = vadd.f32 %v275, %v260
      %v285 = vadd.f32 %v280, %v261
      %v286 = vmax.f32 %v282, 0.0
      %v287 = vmax.f32 %v283, 0.0
      %v288 = vmax.f32 %v284, 0.0
      %v289 = vmax.f32 %v285, 0.0
      %291 = vset.pattern.permute.xlu0 0
      %292 = vperm.xlu0 %291, %v32
      %v293 = vpop.permute.xlu0 %292
      %296 = vset.pattern.permute.xlu0 0
      %297 = vperm.xlu0 %296, %v33
      %v298 = vpop.permute.xlu0 %297
      %301 = vset.pattern.permute.xlu0 0
      %302 = vperm.xlu0 %301, %v34
      %v303 = vpop.permute.xlu0 %302
      %306 = vset.pattern.permute.xlu0 0
      %307 = vperm.xlu0 %306, %v35
      %v308 = vpop.permute.xlu0 %307
      %v310 = vmul.f32 %v286, %v293
      %v311 = vmul.f32 %v287, %v298
      %v312 = vmul.f32 %v288, %v303
      %v313 = vmul.f32 %v289, %v308
      %v314 = vadd.f32 %v310, %v311
      %v315 = vadd.f32 %v314, %v312
      %v316 = vadd.f32 %v315, %v313
      %v317 = vrot.slane %v316, 4
      %v318 = vadd.f32 %v316, %v317
      %v319 = vrot.slane %v318, 2
      %v320 = vadd.f32 %v318, %v319
      %v321 = vrot.slane %v320, 1
      %v322 = vadd.f32 %v320, %v321
      %v323 = vadd.f32 %v257, %v322
      %v324 = vstv %s19
      %v325 = vadd.f32 %v323, %v324
      %s326 = smul.u32 %s37, 8
      %s327 = scalar_lea.vmem [#allocation3], %s326
      %328 = vst [vmem:[%s327] sm:$0x1] %v325
      %v329 = vld [vmem:[%s1] sm:$0xff]
      %v330 = vld [vmem:[%s1 + $0x8] sm:$0xff]
      %v331 = vld [vmem:[%s1 + $0x10] sm:$0xff]
      %v332 = vld [vmem:[%s1 + $0x18] sm:$0xff]
      %333 = vset.pattern.permute.xlu0 1
      %334 = vperm.xlu0 %333, %v44
      %v335 = vpop.permute.xlu0 %334
      %337 = vset.pattern.permute.xlu0 1
      %338 = vperm.xlu0 %337, %v45
      %v339 = vpop.permute.xlu0 %338
      %341 = vset.pattern.permute.xlu0 1
      %342 = vperm.xlu0 %341, %v46
      %v343 = vpop.permute.xlu0 %342
      %345 = vset.pattern.permute.xlu0 1
      %346 = vperm.xlu0 %345, %v47
      %v347 = vpop.permute.xlu0 %346
      %v349 = vadd.f32 %v335, %v329
      %v350 = vadd.f32 %v339, %v330
      %v351 = vadd.f32 %v343, %v331
      %v352 = vadd.f32 %v347, %v332
      %v353 = vmax.f32 %v349, 0.0
      %v354 = vmax.f32 %v350, 0.0
      %v355 = vmax.f32 %v351, 0.0
      %v356 = vmax.f32 %v352, 0.0
      %v357 = vmul.f32 %v353, %v95
      %v358 = vmul.f32 %v354, %v100
      %v359 = vmul.f32 %v355, %v105
      %v360 = vmul.f32 %v356, %v110
      %v361 = vadd.f32 %v357, %v358
      %v362 = vadd.f32 %v361, %v359
      %v363 = vadd.f32 %v362, %v360
      %v364 = vrot.slane %v363, 4
      %v365 = vadd.f32 %v363, %v364
      %v366 = vrot.slane %v365, 2
      %v367 = vadd.f32 %v365, %v366
      %v368 = vrot.slane %v367, 1
      %v369 = vadd.f32 %v367, %v368
      %v370 = vadd.f32 %v369, 0.0
      %v371 = vld [vmem:[%s1 + $0x20] sm:$0xff]
      %v372 = vld [vmem:[%s1 + $0x28] sm:$0xff]
      %v373 = vld [vmem:[%s1 + $0x30] sm:$0xff]
      %v374 = vld [vmem:[%s1 + $0x38] sm:$0xff]
      %375 = vset.pattern.permute.xlu0 1
      %376 = vperm.xlu0 %375, %v48
      %v377 = vpop.permute.xlu0 %376
      %379 = vset.pattern.permute.xlu0 1
      %380 = vperm.xlu0 %379, %v49
      %v381 = vpop.permute.xlu0 %380
      %383 = vset.pattern.permute.xlu0 1
      %384 = vperm.xlu0 %383, %v50
      %v385 = vpop.permute.xlu0 %384
      %387 = vset.pattern.permute.xlu0 1
      %388 = vperm.xlu0 %387, %v51
      %v389 = vpop.permute.xlu0 %388
      %v391 = vadd.f32 %v377, %v371
      %v392 = vadd.f32 %v381, %v372
      %v393 = vadd.f32 %v385, %v373
      %v394 = vadd.f32 %v389, %v374
      %v395 = vmax.f32 %v391, 0.0
      %v396 = vmax.f32 %v392, 0.0
      %v397 = vmax.f32 %v393, 0.0
      %v398 = vmax.f32 %v394, 0.0
      %v399 = vmul.f32 %v395, %v161
      %v400 = vmul.f32 %v396, %v166
      %v401 = vmul.f32 %v397, %v171
      %v402 = vmul.f32 %v398, %v176
      %v403 = vadd.f32 %v399, %v400
      %v404 = vadd.f32 %v403, %v401
      %v405 = vadd.f32 %v404, %v402
      %v406 = vrot.slane %v405, 4
      %v407 = vadd.f32 %v405, %v406
      %v408 = vrot.slane %v407, 2
      %v409 = vadd.f32 %v407, %v408
      %v410 = vrot.slane %v409, 1
      %v411 = vadd.f32 %v409, %v410
      %v412 = vadd.f32 %v370, %v411
      %v413 = vld [vmem:[%s1 + $0x40] sm:$0xff]
      %v414 = vld [vmem:[%s1 + $0x48] sm:$0xff]
      %v415 = vld [vmem:[%s1 + $0x50] sm:$0xff]
      %v416 = vld [vmem:[%s1 + $0x58] sm:$0xff]
      %417 = vset.pattern.permute.xlu0 1
      %418 = vperm.xlu0 %417, %v52
      %v419 = vpop.permute.xlu0 %418
      %421 = vset.pattern.permute.xlu0 1
      %422 = vperm.xlu0 %421, %v53
      %v423 = vpop.permute.xlu0 %422
      %425 = vset.pattern.permute.xlu0 1
      %426 = vperm.xlu0 %425, %v54
      %v427 = vpop.permute.xlu0 %426
      %429 = vset.pattern.permute.xlu0 1
      %430 = vperm.xlu0 %429, %v55
      %v431 = vpop.permute.xlu0 %430
      %v433 = vadd.f32 %v419, %v413
      %v434 = vadd.f32 %v423, %v414
      %v435 = vadd.f32 %v427, %v415
      %v436 = vadd.f32 %v431, %v416
      %v437 = vmax.f32 %v433, 0.0
      %v438 = vmax.f32 %v434, 0.0
      %v439 = vmax.f32 %v435, 0.0
      %v440 = vmax.f32 %v436, 0.0
      %v441 = vmul.f32 %v437, %v227
      %v442 = vmul.f32 %v438, %v232
      %v443 = vmul.f32 %v439, %v237
      %v444 = vmul.f32 %v440, %v242
      %v445 = vadd.f32 %v441, %v442
      %v446 = vadd.f32 %v445, %v443
      %v447 = vadd.f32 %v446, %v444
      %v448 = vrot.slane %v447, 4
      %v449 = vadd.f32 %v447, %v448
      %v450 = vrot.slane %v449, 2
      %v451 = vadd.f32 %v449, %v450
      %v452 = vrot.slane %v451, 1
      %v453 = vadd.f32 %v451, %v452
      %v454 = vadd.f32 %v412, %v453
      %v455 = vld [vmem:[%s1 + $0x60] sm:$0xff]
      %v456 = vld [vmem:[%s1 + $0x68] sm:$0xff]
      %v457 = vld [vmem:[%s1 + $0x70] sm:$0xff]
      %v458 = vld [vmem:[%s1 + $0x78] sm:$0xff]
      %459 = vset.pattern.permute.xlu0 1
      %460 = vperm.xlu0 %459, %v56
      %v461 = vpop.permute.xlu0 %460
      %463 = vset.pattern.permute.xlu0 1
      %464 = vperm.xlu0 %463, %v57
      %v465 = vpop.permute.xlu0 %464
      %467 = vset.pattern.permute.xlu0 1
      %468 = vperm.xlu0 %467, %v58
      %v469 = vpop.permute.xlu0 %468
      %471 = vset.pattern.permute.xlu0 1
      %472 = vperm.xlu0 %471, %v59
      %v473 = vpop.permute.xlu0 %472
      %v475 = vadd.f32 %v461, %v455
      %v476 = vadd.f32 %v465, %v456
      %v477 = vadd.f32 %v469, %v457
      %v478 = vadd.f32 %v473, %v458
      %v479 = vmax.f32 %v475, 0.0
      %v480 = vmax.f32 %v476, 0.0
      %v481 = vmax.f32 %v477, 0.0
      %v482 = vmax.f32 %v478, 0.0
      %v483 = vmul.f32 %v479, %v293
      %v484 = vmul.f32 %v480, %v298
      %v485 = vmul.f32 %v481, %v303
      %v486 = vmul.f32 %v482, %v308
      %v487 = vadd.f32 %v483, %v484
      %v488 = vadd.f32 %v487, %v485
      %v489 = vadd.f32 %v488, %v486
      %v490 = vrot.slane %v489, 4
      %v491 = vadd.f32 %v489, %v490
      %v492 = vrot.slane %v491, 2
      %v493 = vadd.f32 %v491, %v492
      %v494 = vrot.slane %v493, 1
      %v495 = vadd.f32 %v493, %v494
      %v496 = vadd.f32 %v454, %v495
      %v497 = vadd.f32 %v496, %v324
      %s498 = sadd.s32 %s326, 1
      %s499 = scalar_lea.vmem [#allocation3], %s498
      %500 = vst [vmem:[%s499] sm:$0x1] %v497
      %v501 = vld [vmem:[%s1] sm:$0xff]
      %v502 = vld [vmem:[%s1 + $0x8] sm:$0xff]
      %v503 = vld [vmem:[%s1 + $0x10] sm:$0xff]
      %v504 = vld [vmem:[%s1 + $0x18] sm:$0xff]
      %505 = vset.pattern.permute.xlu0 2
      %506 = vperm.xlu0 %505, %v44
      %v507 = vpop.permute.xlu0 %506
      %509 = vset.pattern.permute.xlu0 2
      %510 = vperm.xlu0 %509, %v45
      %v511 = vpop.permute.xlu0 %510
      %513 = vset.pattern.permute.xlu0 2
      %514 = vperm.xlu0 %513, %v46
      %v515 = vpop.permute.xlu0 %514
      %517 = vset.pattern.permute.xlu0 2
      %518 = vperm.xlu0 %517, %v47
      %v519 = vpop.permute.xlu0 %518
      %v521 = vadd.f32 %v507, %v501
      %v522 = vadd.f32 %v511, %v502
      %v523 = vadd.f32 %v515, %v503
      %v524 = vadd.f32 %v519, %v504
      %v525 = vmax.f32 %v521, 0.0
      %v526 = vmax.f32 %v522, 0.0
      %v527 = vmax.f32 %v523, 0.0
      %v528 = vmax.f32 %v524, 0.0
      %v529 = vmul.f32 %v525, %v95
      %v530 = vmul.f32 %v526, %v100
      %v531 = vmul.f32 %v527, %v105
      %v532 = vmul.f32 %v528, %v110
      %v533 = vadd.f32 %v529, %v530
      %v534 = vadd.f32 %v533, %v531
      %v535 = vadd.f32 %v534, %v532
      %v536 = vrot.slane %v535, 4
      %v537 = vadd.f32 %v535, %v536
      %v538 = vrot.slane %v537, 2
      %v539 = vadd.f32 %v537, %v538
      %v540 = vrot.slane %v539, 1
      %v541 = vadd.f32 %v539, %v540
      %v542 = vadd.f32 %v541, 0.0
      %v543 = vld [vmem:[%s1 + $0x20] sm:$0xff]
      %v544 = vld [vmem:[%s1 + $0x28] sm:$0xff]
      %v545 = vld [vmem:[%s1 + $0x30] sm:$0xff]
      %v546 = vld [vmem:[%s1 + $0x38] sm:$0xff]
      %547 = vset.pattern.permute.xlu0 2
      %548 = vperm.xlu0 %547, %v48
      %v549 = vpop.permute.xlu0 %548
      %551 = vset.pattern.permute.xlu0 2
      %552 = vperm.xlu0 %551, %v49
      %v553 = vpop.permute.xlu0 %552
      %555 = vset.pattern.permute.xlu0 2
      %556 = vperm.xlu0 %555, %v50
      %v557 = vpop.permute.xlu0 %556
      %559 = vset.pattern.permute.xlu0 2
      %560 = vperm.xlu0 %559, %v51
      %v561 = vpop.permute.xlu0 %560
      %v563 = vadd.f32 %v549, %v543
      %v564 = vadd.f32 %v553, %v544
      %v565 = vadd.f32 %v557, %v545
      %v566 = vadd.f32 %v561, %v546
      %v567 = vmax.f32 %v563, 0.0
      %v568 = vmax.f32 %v564, 0.0
      %v569 = vmax.f32 %v565, 0.0
      %v570 = vmax.f32 %v566, 0.0
      %v571 = vmul.f32 %v567, %v161
      %v572 = vmul.f32 %v568, %v166
      %v573 = vmul.f32 %v569, %v171
      %v574 = vmul.f32 %v570, %v176
      %v575 = vadd.f32 %v571, %v572
      %v576 = vadd.f32 %v575, %v573
      %v577 = vadd.f32 %v576, %v574
      %v578 = vrot.slane %v577, 4
      %v579 = vadd.f32 %v577, %v578
      %v580 = vrot.slane %v579, 2
      %v581 = vadd.f32 %v579, %v580
      %v582 = vrot.slane %v581, 1
      %v583 = vadd.f32 %v581, %v582
      %v584 = vadd.f32 %v542, %v583
      %v585 = vld [vmem:[%s1 + $0x40] sm:$0xff]
      %v586 = vld [vmem:[%s1 + $0x48] sm:$0xff]
      %v587 = vld [vmem:[%s1 + $0x50] sm:$0xff]
      %v588 = vld [vmem:[%s1 + $0x58] sm:$0xff]
      %589 = vset.pattern.permute.xlu0 2
      %590 = vperm.xlu0 %589, %v52
      %v591 = vpop.permute.xlu0 %590
      %593 = vset.pattern.permute.xlu0 2
      %594 = vperm.xlu0 %593, %v53
      %v595 = vpop.permute.xlu0 %594
      %597 = vset.pattern.permute.xlu0 2
      %598 = vperm.xlu0 %597, %v54
      %v599 = vpop.permute.xlu0 %598
      %601 = vset.pattern.permute.xlu0 2
      %602 = vperm.xlu0 %601, %v55
      %v603 = vpop.permute.xlu0 %602
      %v605 = vadd.f32 %v591, %v585
      %v606 = vadd.f32 %v595, %v586
      %v607 = vadd.f32 %v599, %v587
      %v608 = vadd.f32 %v603, %v588
      %v609 = vmax.f32 %v605, 0.0
      %v610 = vmax.f32 %v606, 0.0
      %v611 = vmax.f32 %v607, 0.0
      %v612 = vmax.f32 %v608, 0.0
      %v613 = vmul.f32 %v609, %v227
      %v614 = vmul.f32 %v610, %v232
      %v615 = vmul.f32 %v611, %v237
      %v616 = vmul.f32 %v612, %v242
      %v617 = vadd.f32 %v613, %v614
      %v618 = vadd.f32 %v617, %v615
      %v619 = vadd.f32 %v618, %v616
      %v620 = vrot.slane %v619, 4
      %v621 = vadd.f32 %v619, %v620
      %v622 = vrot.slane %v621, 2
      %v623 = vadd.f32 %v621, %v622
      %v624 = vrot.slane %v623, 1
      %v625 = vadd.f32 %v623, %v624
      %v626 = vadd.f32 %v584, %v625
      %v627 = vld [vmem:[%s1 + $0x60] sm:$0xff]
      %v628 = vld [vmem:[%s1 + $0x68] sm:$0xff]
      %v629 = vld [vmem:[%s1 + $0x70] sm:$0xff]
      %v630 = vld [vmem:[%s1 + $0x78] sm:$0xff]
      %631 = vset.pattern.permute.xlu0 2
      %632 = vperm.xlu0 %631, %v56
      %v633 = vpop.permute.xlu0 %632
      %635 = vset.pattern.permute.xlu0 2
      %636 = vperm.xlu0 %635, %v57
      %v637 = vpop.permute.xlu0 %636
      %639 = vset.pattern.permute.xlu0 2
      %640 = vperm.xlu0 %639, %v58
      %v641 = vpop.permute.xlu0 %640
      %643 = vset.pattern.permute.xlu0 2
      %644 = vperm.xlu0 %643, %v59
      %v645 = vpop.permute.xlu0 %644
      %v647 = vadd.f32 %v633, %v627
      %v648 = vadd.f32 %v637, %v628
      %v649 = vadd.f32 %v641, %v629
      %v650 = vadd.f32 %v645, %v630
      %v651 = vmax.f32 %v647, 0.0
      %v652 = vmax.f32 %v648, 0.0
      %v653 = vmax.f32 %v649, 0.0
      %v654 = vmax.f32 %v650, 0.0
      %v655 = vmul.f32 %v651, %v293
      %v656 = vmul.f32 %v652, %v298
      %v657 = vmul.f32 %v653, %v303
      %v658 = vmul.f32 %v654, %v308
      %v659 = vadd.f32 %v655, %v656
      %v660 = vadd.f32 %v659, %v657
      %v661 = vadd.f32 %v660, %v658
      %v662 = vrot.slane %v661, 4
      %v663 = vadd.f32 %v661, %v662
      %v664 = vrot.slane %v663, 2
      %v665 = vadd.f32 %v663, %v664
      %v666 = vrot.slane %v665, 1
      %v667 = vadd.f32 %v665, %v666
      %v668 = vadd.f32 %v626, %v667
      %v669 = vadd.f32 %v668, %v324
      %s670 = sadd.s32 %s326, 2
      %s671 = scalar_lea.vmem [#allocation3], %s670
      %672 = vst [vmem:[%s671] sm:$0x1] %v669
      %v673 = vld [vmem:[%s1] sm:$0xff]
      %v674 = vld [vmem:[%s1 + $0x8] sm:$0xff]
      %v675 = vld [vmem:[%s1 + $0x10] sm:$0xff]
      %v676 = vld [vmem:[%s1 + $0x18] sm:$0xff]
      %677 = vset.pattern.permute.xlu0 3
      %678 = vperm.xlu0 %677, %v44
      %v679 = vpop.permute.xlu0 %678
      %681 = vset.pattern.permute.xlu0 3
      %682 = vperm.xlu0 %681, %v45
      %v683 = vpop.permute.xlu0 %682
      %685 = vset.pattern.permute.xlu0 3
      %686 = vperm.xlu0 %685, %v46
      %v687 = vpop.permute.xlu0 %686
      %689 = vset.pattern.permute.xlu0 3
      %690 = vperm.xlu0 %689, %v47
      %v691 = vpop.permute.xlu0 %690
      %v693 = vadd.f32 %v679, %v673
      %v694 = vadd.f32 %v683, %v674
      %v695 = vadd.f32 %v687, %v675
      %v696 = vadd.f32 %v691, %v676
      %v697 = vmax.f32 %v693, 0.0
      %v698 = vmax.f32 %v694, 0.0
      %v699 = vmax.f32 %v695, 0.0
      %v700 = vmax.f32 %v696, 0.0
      %v701 = vmul.f32 %v697, %v95
      %v702 = vmul.f32 %v698, %v100
      %v703 = vmul.f32 %v699, %v105
      %v704 = vmul.f32 %v700, %v110
      %v705 = vadd.f32 %v701, %v702
      %v706 = vadd.f32 %v705, %v703
      %v707 = vadd.f32 %v706, %v704
      %v708 = vrot.slane %v707, 4
      %v709 = vadd.f32 %v707, %v708
      %v710 = vrot.slane %v709, 2
      %v711 = vadd.f32 %v709, %v710
      %v712 = vrot.slane %v711, 1
      %v713 = vadd.f32 %v711, %v712
      %v714 = vadd.f32 %v713, 0.0
      %v715 = vld [vmem:[%s1 + $0x20] sm:$0xff]
      %v716 = vld [vmem:[%s1 + $0x28] sm:$0xff]
      %v717 = vld [vmem:[%s1 + $0x30] sm:$0xff]
      %v718 = vld [vmem:[%s1 + $0x38] sm:$0xff]
      %719 = vset.pattern.permute.xlu0 3
      %720 = vperm.xlu0 %719, %v48
      %v721 = vpop.permute.xlu0 %720
      %723 = vset.pattern.permute.xlu0 3
      %724 = vperm.xlu0 %723, %v49
      %v725 = vpop.permute.xlu0 %724
      %727 = vset.pattern.permute.xlu0 3
      %728 = vperm.xlu0 %727, %v50
      %v729 = vpop.permute.xlu0 %728
      %731 = vset.pattern.permute.xlu0 3
      %732 = vperm.xlu0 %731, %v51
      %v733 = vpop.permute.xlu0 %732
      %v735 = vadd.f32 %v721, %v715
      %v736 = vadd.f32 %v725, %v716
      %v737 = vadd.f32 %v729, %v717
      %v738 = vadd.f32 %v733, %v718
      %v739 = vmax.f32 %v735, 0.0
      %v740 = vmax.f32 %v736, 0.0
      %v741 = vmax.f32 %v737, 0.0
      %v742 = vmax.f32 %v738, 0.0
      %v743 = vmul.f32 %v739, %v161
      %v744 = vmul.f32 %v740, %v166
      %v745 = vmul.f32 %v741, %v171
      %v746 = vmul.f32 %v742, %v176
      %v747 = vadd.f32 %v743, %v744
      %v748 = vadd.f32 %v747, %v745
      %v749 = vadd.f32 %v748, %v746
      %v750 = vrot.slane %v749, 4
      %v751 = vadd.f32 %v749, %v750
      %v752 = vrot.slane %v751, 2
      %v753 = vadd.f32 %v751, %v752
      %v754 = vrot.slane %v753, 1
      %v755 = vadd.f32 %v753, %v754
      %v756 = vadd.f32 %v714, %v755
      %v757 = vld [vmem:[%s1 + $0x40] sm:$0xff]
      %v758 = vld [vmem:[%s1 + $0x48] sm:$0xff]
      %v759 = vld [vmem:[%s1 + $0x50] sm:$0xff]
      %v760 = vld [vmem:[%s1 + $0x58] sm:$0xff]
      %761 = vset.pattern.permute.xlu0 3
      %762 = vperm.xlu0 %761, %v52
      %v763 = vpop.permute.xlu0 %762
      %765 = vset.pattern.permute.xlu0 3
      %766 = vperm.xlu0 %765, %v53
      %v767 = vpop.permute.xlu0 %766
      %769 = vset.pattern.permute.xlu0 3
      %770 = vperm.xlu0 %769, %v54
      %v771 = vpop.permute.xlu0 %770
      %773 = vset.pattern.permute.xlu0 3
      %774 = vperm.xlu0 %773, %v55
      %v775 = vpop.permute.xlu0 %774
      %v777 = vadd.f32 %v763, %v757
      %v778 = vadd.f32 %v767, %v758
      %v779 = vadd.f32 %v771, %v759
      %v780 = vadd.f32 %v775, %v760
      %v781 = vmax.f32 %v777, 0.0
      %v782 = vmax.f32 %v778, 0.0
      %v783 = vmax.f32 %v779, 0.0
      %v784 = vmax.f32 %v780, 0.0
      %v785 = vmul.f32 %v781, %v227
      %v786 = vmul.f32 %v782, %v232
      %v787 = vmul.f32 %v783, %v237
      %v788 = vmul.f32 %v784, %v242
      %v789 = vadd.f32 %v785, %v786
      %v790 = vadd.f32 %v789, %v787
      %v791 = vadd.f32 %v790, %v788
      %v792 = vrot.slane %v791, 4
      %v793 = vadd.f32 %v791, %v792
      %v794 = vrot.slane %v793, 2
      %v795 = vadd.f32 %v793, %v794
      %v796 = vrot.slane %v795, 1
      %v797 = vadd.f32 %v795, %v796
      %v798 = vadd.f32 %v756, %v797
      %v799 = vld [vmem:[%s1 + $0x60] sm:$0xff]
      %v800 = vld [vmem:[%s1 + $0x68] sm:$0xff]
      %v801 = vld [vmem:[%s1 + $0x70] sm:$0xff]
      %v802 = vld [vmem:[%s1 + $0x78] sm:$0xff]
      %803 = vset.pattern.permute.xlu0 3
      %804 = vperm.xlu0 %803, %v56
      %v805 = vpop.permute.xlu0 %804
      %807 = vset.pattern.permute.xlu0 3
      %808 = vperm.xlu0 %807, %v57
      %v809 = vpop.permute.xlu0 %808
      %811 = vset.pattern.permute.xlu0 3
      %812 = vperm.xlu0 %811, %v58
      %v813 = vpop.permute.xlu0 %812
      %815 = vset.pattern.permute.xlu0 3
      %816 = vperm.xlu0 %815, %v59
      %v817 = vpop.permute.xlu0 %816
      %v819 = vadd.f32 %v805, %v799
      %v820 = vadd.f32 %v809, %v800
      %v821 = vadd.f32 %v813, %v801
      %v822 = vadd.f32 %v817, %v802
      %v823 = vmax.f32 %v819, 0.0
      %v824 = vmax.f32 %v820, 0.0
      %v825 = vmax.f32 %v821, 0.0
      %v826 = vmax.f32 %v822, 0.0
      %v827 = vmul.f32 %v823, %v293
      %v828 = vmul.f32 %v824, %v298
      %v829 = vmul.f32 %v825, %v303
      %v830 = vmul.f32 %v826, %v308
      %v831 = vadd.f32 %v827, %v828
      %v832 = vadd.f32 %v831, %v829
      %v833 = vadd.f32 %v832, %v830
      %v834 = vrot.slane %v833, 4
      %v835 = vadd.f32 %v833, %v834
      %v836 = vrot.slane %v835, 2
      %v837 = vadd.f32 %v835, %v836
      %v838 = vrot.slane %v837, 1
      %v839 = vadd.f32 %v837, %v838
      %v840 = vadd.f32 %v798, %v839
      %v841 = vadd.f32 %v840, %v324
      %s842 = sadd.s32 %s326, 3
      %s843 = scalar_lea.vmem [#allocation3], %s842
      %844 = vst [vmem:[%s843] sm:$0x1] %v841
      %v845 = vld [vmem:[%s1] sm:$0xff]
      %v846 = vld [vmem:[%s1 + $0x8] sm:$0xff]
      %v847 = vld [vmem:[%s1 + $0x10] sm:$0xff]
      %v848 = vld [vmem:[%s1 + $0x18] sm:$0xff]
      %849 = vset.pattern.permute.xlu0 4
      %850 = vperm.xlu0 %849, %v44
      %v851 = vpop.permute.xlu0 %850
      %853 = vset.pattern.permute.xlu0 4
      %854 = vperm.xlu0 %853, %v45
      %v855 = vpop.permute.xlu0 %854
      %857 = vset.pattern.permute.xlu0 4
      %858 = vperm.xlu0 %857, %v46
      %v859 = vpop.permute.xlu0 %858
      %861 = vset.pattern.permute.xlu0 4
      %862 = vperm.xlu0 %861, %v47
      %v863 = vpop.permute.xlu0 %862
      %v865 = vadd.f32 %v851, %v845
      %v866 = vadd.f32 %v855, %v846
      %v867 = vadd.f32 %v859, %v847
      %v868 = vadd.f32 %v863, %v848
      %v869 = vmax.f32 %v865, 0.0
      %v870 = vmax.f32 %v866, 0.0
      %v871 = vmax.f32 %v867, 0.0
      %v872 = vmax.f32 %v868, 0.0
      %v873 = vmul.f32 %v869, %v95
      %v874 = vmul.f32 %v870, %v100
      %v875 = vmul.f32 %v871, %v105
      %v876 = vmul.f32 %v872, %v110
      %v877 = vadd.f32 %v873, %v874
      %v878 = vadd.f32 %v877, %v875
      %v879 = vadd.f32 %v878, %v876
      %v880 = vrot.slane %v879, 4
      %v881 = vadd.f32 %v879, %v880
      %v882 = vrot.slane %v881, 2
      %v883 = vadd.f32 %v881, %v882
      %v884 = vrot.slane %v883, 1
      %v885 = vadd.f32 %v883, %v884
      %v886 = vadd.f32 %v885, 0.0
      %v887 = vld [vmem:[%s1 + $0x20] sm:$0xff]
      %v888 = vld [vmem:[%s1 + $0x28] sm:$0xff]
      %v889 = vld [vmem:[%s1 + $0x30] sm:$0xff]
      %v890 = vld [vmem:[%s1 + $0x38] sm:$0xff]
      %891 = vset.pattern.permute.xlu0 4
      %892 = vperm.xlu0 %891, %v48
      %v893 = vpop.permute.xlu0 %892
      %895 = vset.pattern.permute.xlu0 4
      %896 = vperm.xlu0 %895, %v49
      %v897 = vpop.permute.xlu0 %896
      %899 = vset.pattern.permute.xlu0 4
      %900 = vperm.xlu0 %899, %v50
      %v901 = vpop.permute.xlu0 %900
      %903 = vset.pattern.permute.xlu0 4
      %904 = vperm.xlu0 %903, %v51
      %v905 = vpop.permute.xlu0 %904
      %v907 = vadd.f32 %v893, %v887
      %v908 = vadd.f32 %v897, %v888
      %v909 = vadd.f32 %v901, %v889
      %v910 = vadd.f32 %v905, %v890
      %v911 = vmax.f32 %v907, 0.0
      %v912 = vmax.f32 %v908, 0.0
      %v913 = vmax.f32 %v909, 0.0
      %v914 = vmax.f32 %v910, 0.0
      %v915 = vmul.f32 %v911, %v161
      %v916 = vmul.f32 %v912, %v166
      %v917 = vmul.f32 %v913, %v171
      %v918 = vmul.f32 %v914, %v176
      %v919 = vadd.f32 %v915, %v916
      %v920 = vadd.f32 %v919, %v917
      %v921 = vadd.f32 %v920, %v918
      %v922 = vrot.slane %v921, 4
      %v923 = vadd.f32 %v921, %v922
      %v924 = vrot.slane %v923, 2
      %v925 = vadd.f32 %v923, %v924
      %v926 = vrot.slane %v925, 1
      %v927 = vadd.f32 %v925, %v926
      %v928 = vadd.f32 %v886, %v927
      %v929 = vld [vmem:[%s1 + $0x40] sm:$0xff]
      %v930 = vld [vmem:[%s1 + $0x48] sm:$0xff]
      %v931 = vld [vmem:[%s1 + $0x50] sm:$0xff]
      %v932 = vld [vmem:[%s1 + $0x58] sm:$0xff]
      %933 = vset.pattern.permute.xlu0 4
      %934 = vperm.xlu0 %933, %v52
      %v935 = vpop.permute.xlu0 %934
      %937 = vset.pattern.permute.xlu0 4
      %938 = vperm.xlu0 %937, %v53
      %v939 = vpop.permute.xlu0 %938
      %941 = vset.pattern.permute.xlu0 4
      %942 = vperm.xlu0 %941, %v54
      %v943 = vpop.permute.xlu0 %942
      %945 = vset.pattern.permute.xlu0 4
      %946 = vperm.xlu0 %945, %v55
      %v947 = vpop.permute.xlu0 %946
      %v949 = vadd.f32 %v935, %v929
      %v950 = vadd.f32 %v939, %v930
      %v951 = vadd.f32 %v943, %v931
      %v952 = vadd.f32 %v947, %v932
      %v953 = vmax.f32 %v949, 0.0
      %v954 = vmax.f32 %v950, 0.0
      %v955 = vmax.f32 %v951, 0.0
      %v956 = vmax.f32 %v952, 0.0
      %v957 = vmul.f32 %v953, %v227
      %v958 = vmul.f32 %v954, %v232
      %v959 = vmul.f32 %v955, %v237
      %v960 = vmul.f32 %v956, %v242
      %v961 = vadd.f32 %v957, %v958
      %v962 = vadd.f32 %v961, %v959
      %v963 = vadd.f32 %v962, %v960
      %v964 = vrot.slane %v963, 4
      %v965 = vadd.f32 %v963, %v964
      %v966 = vrot.slane %v965, 2
      %v967 = vadd.f32 %v965, %v966
      %v968 = vrot.slane %v967, 1
      %v969 = vadd.f32 %v967, %v968
      %v970 = vadd.f32 %v928, %v969
      %v971 = vld [vmem:[%s1 + $0x60] sm:$0xff]
      %v972 = vld [vmem:[%s1 + $0x68] sm:$0xff]
      %v973 = vld [vmem:[%s1 + $0x70] sm:$0xff]
      %v974 = vld [vmem:[%s1 + $0x78] sm:$0xff]
      %975 = vset.pattern.permute.xlu0 4
      %976 = vperm.xlu0 %975, %v56
      %v977 = vpop.permute.xlu0 %976
      %979 = vset.pattern.permute.xlu0 4
      %980 = vperm.xlu0 %979, %v57
      %v981 = vpop.permute.xlu0 %980
      %983 = vset.pattern.permute.xlu0 4
      %984 = vperm.xlu0 %983, %v58
      %v985 = vpop.permute.xlu0 %984
      %987 = vset.pattern.permute.xlu0 4
      %988 = vperm.xlu0 %987, %v59
      %v989 = vpop.permute.xlu0 %988
      %v991 = vadd.f32 %v977, %v971
      %v992 = vadd.f32 %v981, %v972
      %v993 = vadd.f32 %v985, %v973
      %v994 = vadd.f32 %v989, %v974
      %v995 = vmax.f32 %v991, 0.0
      %v996 = vmax.f32 %v992, 0.0
      %v997 = vmax.f32 %v993, 0.0
      %v998 = vmax.f32 %v994, 0.0
      %v999 = vmul.f32 %v995, %v293
      %v1000 = vmul.f32 %v996, %v298
      %v1001 = vmul.f32 %v997, %v303
      %v1002 = vmul.f32 %v998, %v308
      %v1003 = vadd.f32 %v999, %v1000
      %v1004 = vadd.f32 %v1003, %v1001
      %v1005 = vadd.f32 %v1004, %v1002
      %v1006 = vrot.slane %v1005, 4
      %v1007 = vadd.f32 %v1005, %v1006
      %v1008 = vrot.slane %v1007, 2
      %v1009 = vadd.f32 %v1007, %v1008
      %v1010 = vrot.slane %v1009, 1
      %v1011 = vadd.f32 %v1009, %v1010
      %v1012 = vadd.f32 %v970, %v1011
      %v1013 = vadd.f32 %v1012, %v324
      %s1014 = sadd.s32 %s326, 4
      %s1015 = scalar_lea.vmem [#allocation3], %s1014
      %1016 = vst [vmem:[%s1015] sm:$0x1] %v1013
      %v1017 = vld [vmem:[%s1] sm:$0xff]
      %v1018 = vld [vmem:[%s1 + $0x8] sm:$0xff]
      %v1019 = vld [vmem:[%s1 + $0x10] sm:$0xff]
      %v1020 = vld [vmem:[%s1 + $0x18] sm:$0xff]
      %1021 = vset.pattern.permute.xlu0 5
      %1022 = vperm.xlu0 %1021, %v44
      %v1023 = vpop.permute.xlu0 %1022
      %1025 = vset.pattern.permute.xlu0 5
      %1026 = vperm.xlu0 %1025, %v45
      %v1027 = vpop.permute.xlu0 %1026
      %1029 = vset.pattern.permute.xlu0 5
      %1030 = vperm.xlu0 %1029, %v46
      %v1031 = vpop.permute.xlu0 %1030
      %1033 = vset.pattern.permute.xlu0 5
      %1034 = vperm.xlu0 %1033, %v47
      %v1035 = vpop.permute.xlu0 %1034
      %v1037 = vadd.f32 %v1023, %v1017
      %v1038 = vadd.f32 %v1027, %v1018
      %v1039 = vadd.f32 %v1031, %v1019
      %v1040 = vadd.f32 %v1035, %v1020
      %v1041 = vmax.f32 %v1037, 0.0
      %v1042 = vmax.f32 %v1038, 0.0
      %v1043 = vmax.f32 %v1039, 0.0
      %v1044 = vmax.f32 %v1040, 0.0
      %v1045 = vmul.f32 %v1041, %v95
      %v1046 = vmul.f32 %v1042, %v100
      %v1047 = vmul.f32 %v1043, %v105
      %v1048 = vmul.f32 %v1044, %v110
      %v1049 = vadd.f32 %v1045, %v1046
      %v1050 = vadd.f32 %v1049, %v1047
      %v1051 = vadd.f32 %v1050, %v1048
      %v1052 = vrot.slane %v1051, 4
      %v1053 = vadd.f32 %v1051, %v1052
      %v1054 = vrot.slane %v1053, 2
      %v1055 = vadd.f32 %v1053, %v1054
      %v1056 = vrot.slane %v1055, 1
      %v1057 = vadd.f32 %v1055, %v1056
      %v1058 = vadd.f32 %v1057, 0.0
      %v1059 = vld [vmem:[%s1 + $0x20] sm:$0xff]
      %v1060 = vld [vmem:[%s1 + $0x28] sm:$0xff]
      %v1061 = vld [vmem:[%s1 + $0x30] sm:$0xff]
      %v1062 = vld [vmem:[%s1 + $0x38] sm:$0xff]
      %1063 = vset.pattern.permute.xlu0 5
      %1064 = vperm.xlu0 %1063, %v48
      %v1065 = vpop.permute.xlu0 %1064
      %1067 = vset.pattern.permute.xlu0 5
      %1068 = vperm.xlu0 %1067, %v49
      %v1069 = vpop.permute.xlu0 %1068
      %1071 = vset.pattern.permute.xlu0 5
      %1072 = vperm.xlu0 %1071, %v50
      %v1073 = vpop.permute.xlu0 %1072
      %1075 = vset.pattern.permute.xlu0 5
      %1076 = vperm.xlu0 %1075, %v51
      %v1077 = vpop.permute.xlu0 %1076
      %v1079 = vadd.f32 %v1065, %v1059
      %v1080 = vadd.f32 %v1069, %v1060
      %v1081 = vadd.f32 %v1073, %v1061
      %v1082 = vadd.f32 %v1077, %v1062
      %v1083 = vmax.f32 %v1079, 0.0
      %v1084 = vmax.f32 %v1080, 0.0
      %v1085 = vmax.f32 %v1081, 0.0
      %v1086 = vmax.f32 %v1082, 0.0
      %v1087 = vmul.f32 %v1083, %v161
      %v1088 = vmul.f32 %v1084, %v166
      %v1089 = vmul.f32 %v1085, %v171
      %v1090 = vmul.f32 %v1086, %v176
      %v1091 = vadd.f32 %v1087, %v1088
      %v1092 = vadd.f32 %v1091, %v1089
      %v1093 = vadd.f32 %v1092, %v1090
      %v1094 = vrot.slane %v1093, 4
      %v1095 = vadd.f32 %v1093, %v1094
      %v1096 = vrot.slane %v1095, 2
      %v1097 = vadd.f32 %v1095, %v1096
      %v1098 = vrot.slane %v1097, 1
      %v1099 = vadd.f32 %v1097, %v1098
      %v1100 = vadd.f32 %v1058, %v1099
      %v1101 = vld [vmem:[%s1 + $0x40] sm:$0xff]
      %v1102 = vld [vmem:[%s1 + $0x48] sm:$0xff]
      %v1103 = vld [vmem:[%s1 + $0x50] sm:$0xff]
      %v1104 = vld [vmem:[%s1 + $0x58] sm:$0xff]
      %1105 = vset.pattern.permute.xlu0 5
      %1106 = vperm.xlu0 %1105, %v52
      %v1107 = vpop.permute.xlu0 %1106
      %1109 = vset.pattern.permute.xlu0 5
      %1110 = vperm.xlu0 %1109, %v53
      %v1111 = vpop.permute.xlu0 %1110
      %1113 = vset.pattern.permute.xlu0 5
      %1114 = vperm.xlu0 %1113, %v54
      %v1115 = vpop.permute.xlu0 %1114
      %1117 = vset.pattern.permute.xlu0 5
      %1118 = vperm.xlu0 %1117, %v55
      %v1119 = vpop.permute.xlu0 %1118
      %v1121 = vadd.f32 %v1107, %v1101
      %v1122 = vadd.f32 %v1111, %v1102
      %v1123 = vadd.f32 %v1115, %v1103
      %v1124 = vadd.f32 %v1119, %v1104
      %v1125 = vmax.f32 %v1121, 0.0
      %v1126 = vmax.f32 %v1122, 0.0
      %v1127 = vmax.f32 %v1123, 0.0
      %v1128 = vmax.f32 %v1124, 0.0
      %v1129 = vmul.f32 %v1125, %v227
      %v1130 = vmul.f32 %v1126, %v232
      %v1131 = vmul.f32 %v1127, %v237
      %v1132 = vmul.f32 %v1128, %v242
      %v1133 = vadd.f32 %v1129, %v1130
      %v1134 = vadd.f32 %v1133, %v1131
      %v1135 = vadd.f32 %v1134, %v1132
      %v1136 = vrot.slane %v1135, 4
      %v1137 = vadd.f32 %v1135, %v1136
      %v1138 = vrot.slane %v1137, 2
      %v1139 = vadd.f32 %v1137, %v1138
      %v1140 = vrot.slane %v1139, 1
      %v1141 = vadd.f32 %v1139, %v1140
      %v1142 = vadd.f32 %v1100, %v1141
      %v1143 = vld [vmem:[%s1 + $0x60] sm:$0xff]
      %v1144 = vld [vmem:[%s1 + $0x68] sm:$0xff]
      %v1145 = vld [vmem:[%s1 + $0x70] sm:$0xff]
      %v1146 = vld [vmem:[%s1 + $0x78] sm:$0xff]
      %1147 = vset.pattern.permute.xlu0 5
      %1148 = vperm.xlu0 %1147, %v56
      %v1149 = vpop.permute.xlu0 %1148
      %1151 = vset.pattern.permute.xlu0 5
      %1152 = vperm.xlu0 %1151, %v57
      %v1153 = vpop.permute.xlu0 %1152
      %1155 = vset.pattern.permute.xlu0 5
      %1156 = vperm.xlu0 %1155, %v58
      %v1157 = vpop.permute.xlu0 %1156
      %1159 = vset.pattern.permute.xlu0 5
      %1160 = vperm.xlu0 %1159, %v59
      %v1161 = vpop.permute.xlu0 %1160
      %v1163 = vadd.f32 %v1149, %v1143
      %v1164 = vadd.f32 %v1153, %v1144
      %v1165 = vadd.f32 %v1157, %v1145
      %v1166 = vadd.f32 %v1161, %v1146
      %v1167 = vmax.f32 %v1163, 0.0
      %v1168 = vmax.f32 %v1164, 0.0
      %v1169 = vmax.f32 %v1165, 0.0
      %v1170 = vmax.f32 %v1166, 0.0
      %v1171 = vmul.f32 %v1167, %v293
      %v1172 = vmul.f32 %v1168, %v298
      %v1173 = vmul.f32 %v1169, %v303
      %v1174 = vmul.f32 %v1170, %v308
      %v1175 = vadd.f32 %v1171, %v1172
      %v1176 = vadd.f32 %v1175, %v1173
      %v1177 = vadd.f32 %v1176, %v1174
      %v1178 = vrot.slane %v1177, 4
      %v1179 = vadd.f32 %v1177, %v1178
      %v1180 = vrot.slane %v1179, 2
      %v1181 = vadd.f32 %v1179, %v1180
      %v1182 = vrot.slane %v1181, 1
      %v1183 = vadd.f32 %v1181, %v1182
      %v1184 = vadd.f32 %v1142, %v1183
      %v1185 = vadd.f32 %v1184, %v324
      %s1186 = sadd.s32 %s326, 5
      %s1187 = scalar_lea.vmem [#allocation3], %s1186
      %1188 = vst [vmem:[%s1187] sm:$0x1] %v1185
      %v1189 = vld [vmem:[%s1] sm:$0xff]
      %v1190 = vld [vmem:[%s1 + $0x8] sm:$0xff]
      %v1191 = vld [vmem:[%s1 + $0x10] sm:$0xff]
      %v1192 = vld [vmem:[%s1 + $0x18] sm:$0xff]
      %1193 = vset.pattern.permute.xlu0 6
      %1194 = vperm.xlu0 %1193, %v44
      %v1195 = vpop.permute.xlu0 %1194
      %1197 = vset.pattern.permute.xlu0 6
      %1198 = vperm.xlu0 %1197, %v45
      %v1199 = vpop.permute.xlu0 %1198
      %1201 = vset.pattern.permute.xlu0 6
      %1202 = vperm.xlu0 %1201, %v46
      %v1203 = vpop.permute.xlu0 %1202
      %1205 = vset.pattern.permute.xlu0 6
      %1206 = vperm.xlu0 %1205, %v47
      %v1207 = vpop.permute.xlu0 %1206
      %v1209 = vadd.f32 %v1195, %v1189
      %v1210 = vadd.f32 %v1199, %v1190
      %v1211 = vadd.f32 %v1203, %v1191
      %v1212 = vadd.f32 %v1207, %v1192
      %v1213 = vmax.f32 %v1209, 0.0
      %v1214 = vmax.f32 %v1210, 0.0
      %v1215 = vmax.f32 %v1211, 0.0
      %v1216 = vmax.f32 %v1212, 0.0
      %v1217 = vmul.f32 %v1213, %v95
      %v1218 = vmul.f32 %v1214, %v100
      %v1219 = vmul.f32 %v1215, %v105
      %v1220 = vmul.f32 %v1216, %v110
      %v1221 = vadd.f32 %v1217, %v1218
      %v1222 = vadd.f32 %v1221, %v1219
      %v1223 = vadd.f32 %v1222, %v1220
      %v1224 = vrot.slane %v1223, 4
      %v1225 = vadd.f32 %v1223, %v1224
      %v1226 = vrot.slane %v1225, 2
      %v1227 = vadd.f32 %v1225, %v1226
      %v1228 = vrot.slane %v1227, 1
      %v1229 = vadd.f32 %v1227, %v1228
      %v1230 = vadd.f32 %v1229, 0.0
      %v1231 = vld [vmem:[%s1 + $0x20] sm:$0xff]
      %v1232 = vld [vmem:[%s1 + $0x28] sm:$0xff]
      %v1233 = vld [vmem:[%s1 + $0x30] sm:$0xff]
      %v1234 = vld [vmem:[%s1 + $0x38] sm:$0xff]
      %1235 = vset.pattern.permute.xlu0 6
      %1236 = vperm.xlu0 %1235, %v48
      %v1237 = vpop.permute.xlu0 %1236
      %1239 = vset.pattern.permute.xlu0 6
      %1240 = vperm.xlu0 %1239, %v49
      %v1241 = vpop.permute.xlu0 %1240
      %1243 = vset.pattern.permute.xlu0 6
      %1244 = vperm.xlu0 %1243, %v50
      %v1245 = vpop.permute.xlu0 %1244
      %1247 = vset.pattern.permute.xlu0 6
      %1248 = vperm.xlu0 %1247, %v51
      %v1249 = vpop.permute.xlu0 %1248
      %v1251 = vadd.f32 %v1237, %v1231
      %v1252 = vadd.f32 %v1241, %v1232
      %v1253 = vadd.f32 %v1245, %v1233
      %v1254 = vadd.f32 %v1249, %v1234
      %v1255 = vmax.f32 %v1251, 0.0
      %v1256 = vmax.f32 %v1252, 0.0
      %v1257 = vmax.f32 %v1253, 0.0
      %v1258 = vmax.f32 %v1254, 0.0
      %v1259 = vmul.f32 %v1255, %v161
      %v1260 = vmul.f32 %v1256, %v166
      %v1261 = vmul.f32 %v1257, %v171
      %v1262 = vmul.f32 %v1258, %v176
      %v1263 = vadd.f32 %v1259, %v1260
      %v1264 = vadd.f32 %v1263, %v1261
      %v1265 = vadd.f32 %v1264, %v1262
      %v1266 = vrot.slane %v1265, 4
      %v1267 = vadd.f32 %v1265, %v1266
      %v1268 = vrot.slane %v1267, 2
      %v1269 = vadd.f32 %v1267, %v1268
      %v1270 = vrot.slane %v1269, 1
      %v1271 = vadd.f32 %v1269, %v1270
      %v1272 = vadd.f32 %v1230, %v1271
      %v1273 = vld [vmem:[%s1 + $0x40] sm:$0xff]
      %v1274 = vld [vmem:[%s1 + $0x48] sm:$0xff]
      %v1275 = vld [vmem:[%s1 + $0x50] sm:$0xff]
      %v1276 = vld [vmem:[%s1 + $0x58] sm:$0xff]
      %1277 = vset.pattern.permute.xlu0 6
      %1278 = vperm.xlu0 %1277, %v52
      %v1279 = vpop.permute.xlu0 %1278
      %1281 = vset.pattern.permute.xlu0 6
      %1282 = vperm.xlu0 %1281, %v53
      %v1283 = vpop.permute.xlu0 %1282
      %1285 = vset.pattern.permute.xlu0 6
      %1286 = vperm.xlu0 %1285, %v54
      %v1287 = vpop.permute.xlu0 %1286
      %1289 = vset.pattern.permute.xlu0 6
      %1290 = vperm.xlu0 %1289, %v55
      %v1291 = vpop.permute.xlu0 %1290
      %v1293 = vadd.f32 %v1279, %v1273
      %v1294 = vadd.f32 %v1283, %v1274
      %v1295 = vadd.f32 %v1287, %v1275
      %v1296 = vadd.f32 %v1291, %v1276
      %v1297 = vmax.f32 %v1293, 0.0
      %v1298 = vmax.f32 %v1294, 0.0
      %v1299 = vmax.f32 %v1295, 0.0
      %v1300 = vmax.f32 %v1296, 0.0
      %v1301 = vmul.f32 %v1297, %v227
      %v1302 = vmul.f32 %v1298, %v232
      %v1303 = vmul.f32 %v1299, %v237
      %v1304 = vmul.f32 %v1300, %v242
      %v1305 = vadd.f32 %v1301, %v1302
      %v1306 = vadd.f32 %v1305, %v1303
      %v1307 = vadd.f32 %v1306, %v1304
      %v1308 = vrot.slane %v1307, 4
      %v1309 = vadd.f32 %v1307, %v1308
      %v1310 = vrot.slane %v1309, 2
      %v1311 = vadd.f32 %v1309, %v1310
      %v1312 = vrot.slane %v1311, 1
      %v1313 = vadd.f32 %v1311, %v1312
      %v1314 = vadd.f32 %v1272, %v1313
      %v1315 = vld [vmem:[%s1 + $0x60] sm:$0xff]
      %v1316 = vld [vmem:[%s1 + $0x68] sm:$0xff]
      %v1317 = vld [vmem:[%s1 + $0x70] sm:$0xff]
      %v1318 = vld [vmem:[%s1 + $0x78] sm:$0xff]
      %1319 = vset.pattern.permute.xlu0 6
      %1320 = vperm.xlu0 %1319, %v56
      %v1321 = vpop.permute.xlu0 %1320
      %1323 = vset.pattern.permute.xlu0 6
      %1324 = vperm.xlu0 %1323, %v57
      %v1325 = vpop.permute.xlu0 %1324
      %1327 = vset.pattern.permute.xlu0 6
      %1328 = vperm.xlu0 %1327, %v58
      %v1329 = vpop.permute.xlu0 %1328
      %1331 = vset.pattern.permute.xlu0 6
      %1332 = vperm.xlu0 %1331, %v59
      %v1333 = vpop.permute.xlu0 %1332
      %v1335 = vadd.f32 %v1321, %v1315
      %v1336 = vadd.f32 %v1325, %v1316
      %v1337 = vadd.f32 %v1329, %v1317
      %v1338 = vadd.f32 %v1333, %v1318
      %v1339 = vmax.f32 %v1335, 0.0
      %v1340 = vmax.f32 %v1336, 0.0
      %v1341 = vmax.f32 %v1337, 0.0
      %v1342 = vmax.f32 %v1338, 0.0
      %v1343 = vmul.f32 %v1339, %v293
      %v1344 = vmul.f32 %v1340, %v298
      %v1345 = vmul.f32 %v1341, %v303
      %v1346 = vmul.f32 %v1342, %v308
      %v1347 = vadd.f32 %v1343, %v1344
      %v1348 = vadd.f32 %v1347, %v1345
      %v1349 = vadd.f32 %v1348, %v1346
      %v1350 = vrot.slane %v1349, 4
      %v1351 = vadd.f32 %v1349, %v1350
      %v1352 = vrot.slane %v1351, 2
      %v1353 = vadd.f32 %v1351, %v1352
      %v1354 = vrot.slane %v1353, 1
      %v1355 = vadd.f32 %v1353, %v1354
      %v1356 = vadd.f32 %v1314, %v1355
      %v1357 = vadd.f32 %v1356, %v324
      %s1358 = sadd.s32 %s326, 6
      %s1359 = scalar_lea.vmem [#allocation3], %s1358
      %1360 = vst [vmem:[%s1359] sm:$0x1] %v1357
      %v1361 = vld [vmem:[%s1] sm:$0xff]
      %v1362 = vld [vmem:[%s1 + $0x8] sm:$0xff]
      %v1363 = vld [vmem:[%s1 + $0x10] sm:$0xff]
      %v1364 = vld [vmem:[%s1 + $0x18] sm:$0xff]
      %1365 = vset.pattern.permute.xlu0 7
      %1366 = vperm.xlu0 %1365, %v44
      %v1367 = vpop.permute.xlu0 %1366
      %1369 = vset.pattern.permute.xlu0 7
      %1370 = vperm.xlu0 %1369, %v45
      %v1371 = vpop.permute.xlu0 %1370
      %1373 = vset.pattern.permute.xlu0 7
      %1374 = vperm.xlu0 %1373, %v46
      %v1375 = vpop.permute.xlu0 %1374
      %1377 = vset.pattern.permute.xlu0 7
      %1378 = vperm.xlu0 %1377, %v47
      %v1379 = vpop.permute.xlu0 %1378
      %v1381 = vadd.f32 %v1367, %v1361
      %v1382 = vadd.f32 %v1371, %v1362
      %v1383 = vadd.f32 %v1375, %v1363
      %v1384 = vadd.f32 %v1379, %v1364
      %v1385 = vmax.f32 %v1381, 0.0
      %v1386 = vmax.f32 %v1382, 0.0
      %v1387 = vmax.f32 %v1383, 0.0
      %v1388 = vmax.f32 %v1384, 0.0
      %v1389 = vmul.f32 %v1385, %v95
      %v1390 = vmul.f32 %v1386, %v100
      %v1391 = vmul.f32 %v1387, %v105
      %v1392 = vmul.f32 %v1388, %v110
      %v1393 = vadd.f32 %v1389, %v1390
      %v1394 = vadd.f32 %v1393, %v1391
      %v1395 = vadd.f32 %v1394, %v1392
      %v1396 = vrot.slane %v1395, 4
      %v1397 = vadd.f32 %v1395, %v1396
      %v1398 = vrot.slane %v1397, 2
      %v1399 = vadd.f32 %v1397, %v1398
      %v1400 = vrot.slane %v1399, 1
      %v1401 = vadd.f32 %v1399, %v1400
      %v1402 = vadd.f32 %v1401, 0.0
      %v1403 = vld [vmem:[%s1 + $0x20] sm:$0xff]
      %v1404 = vld [vmem:[%s1 + $0x28] sm:$0xff]
      %v1405 = vld [vmem:[%s1 + $0x30] sm:$0xff]
      %v1406 = vld [vmem:[%s1 + $0x38] sm:$0xff]
      %1407 = vset.pattern.permute.xlu0 7
      %1408 = vperm.xlu0 %1407, %v48
      %v1409 = vpop.permute.xlu0 %1408
      %1411 = vset.pattern.permute.xlu0 7
      %1412 = vperm.xlu0 %1411, %v49
      %v1413 = vpop.permute.xlu0 %1412
      %1415 = vset.pattern.permute.xlu0 7
      %1416 = vperm.xlu0 %1415, %v50
      %v1417 = vpop.permute.xlu0 %1416
      %1419 = vset.pattern.permute.xlu0 7
      %1420 = vperm.xlu0 %1419, %v51
      %v1421 = vpop.permute.xlu0 %1420
      %v1423 = vadd.f32 %v1409, %v1403
      %v1424 = vadd.f32 %v1413, %v1404
      %v1425 = vadd.f32 %v1417, %v1405
      %v1426 = vadd.f32 %v1421, %v1406
      %v1427 = vmax.f32 %v1423, 0.0
      %v1428 = vmax.f32 %v1424, 0.0
      %v1429 = vmax.f32 %v1425, 0.0
      %v1430 = vmax.f32 %v1426, 0.0
      %v1431 = vmul.f32 %v1427, %v161
      %v1432 = vmul.f32 %v1428, %v166
      %v1433 = vmul.f32 %v1429, %v171
      %v1434 = vmul.f32 %v1430, %v176
      %v1435 = vadd.f32 %v1431, %v1432
      %v1436 = vadd.f32 %v1435, %v1433
      %v1437 = vadd.f32 %v1436, %v1434
      %v1438 = vrot.slane %v1437, 4
      %v1439 = vadd.f32 %v1437, %v1438
      %v1440 = vrot.slane %v1439, 2
      %v1441 = vadd.f32 %v1439, %v1440
      %v1442 = vrot.slane %v1441, 1
      %v1443 = vadd.f32 %v1441, %v1442
      %v1444 = vadd.f32 %v1402, %v1443
      %v1445 = vld [vmem:[%s1 + $0x40] sm:$0xff]
      %v1446 = vld [vmem:[%s1 + $0x48] sm:$0xff]
      %v1447 = vld [vmem:[%s1 + $0x50] sm:$0xff]
      %v1448 = vld [vmem:[%s1 + $0x58] sm:$0xff]
      %1449 = vset.pattern.permute.xlu0 7
      %1450 = vperm.xlu0 %1449, %v52
      %v1451 = vpop.permute.xlu0 %1450
      %1453 = vset.pattern.permute.xlu0 7
      %1454 = vperm.xlu0 %1453, %v53
      %v1455 = vpop.permute.xlu0 %1454
      %1457 = vset.pattern.permute.xlu0 7
      %1458 = vperm.xlu0 %1457, %v54
      %v1459 = vpop.permute.xlu0 %1458
      %1461 = vset.pattern.permute.xlu0 7
      %1462 = vperm.xlu0 %1461, %v55
      %v1463 = vpop.permute.xlu0 %1462
      %v1465 = vadd.f32 %v1451, %v1445
      %v1466 = vadd.f32 %v1455, %v1446
      %v1467 = vadd.f32 %v1459, %v1447
      %v1468 = vadd.f32 %v1463, %v1448
      %v1469 = vmax.f32 %v1465, 0.0
      %v1470 = vmax.f32 %v1466, 0.0
      %v1471 = vmax.f32 %v1467, 0.0
      %v1472 = vmax.f32 %v1468, 0.0
      %v1473 = vmul.f32 %v1469, %v227
      %v1474 = vmul.f32 %v1470, %v232
      %v1475 = vmul.f32 %v1471, %v237
      %v1476 = vmul.f32 %v1472, %v242
      %v1477 = vadd.f32 %v1473, %v1474
      %v1478 = vadd.f32 %v1477, %v1475
      %v1479 = vadd.f32 %v1478, %v1476
      %v1480 = vrot.slane %v1479, 4
      %v1481 = vadd.f32 %v1479, %v1480
      %v1482 = vrot.slane %v1481, 2
      %v1483 = vadd.f32 %v1481, %v1482
      %v1484 = vrot.slane %v1483, 1
      %v1485 = vadd.f32 %v1483, %v1484
      %v1486 = vadd.f32 %v1444, %v1485
      %v1487 = vld [vmem:[%s1 + $0x60] sm:$0xff]
      %v1488 = vld [vmem:[%s1 + $0x68] sm:$0xff]
      %v1489 = vld [vmem:[%s1 + $0x70] sm:$0xff]
      %v1490 = vld [vmem:[%s1 + $0x78] sm:$0xff]
      %1491 = vset.pattern.permute.xlu0 7
      %1492 = vperm.xlu0 %1491, %v56
      %v1493 = vpop.permute.xlu0 %1492
      %1495 = vset.pattern.permute.xlu0 7
      %1496 = vperm.xlu0 %1495, %v57
      %v1497 = vpop.permute.xlu0 %1496
      %1499 = vset.pattern.permute.xlu0 7
      %1500 = vperm.xlu0 %1499, %v58
      %v1501 = vpop.permute.xlu0 %1500
      %1503 = vset.pattern.permute.xlu0 7
      %1504 = vperm.xlu0 %1503, %v59
      %v1505 = vpop.permute.xlu0 %1504
      %v1507 = vadd.f32 %v1493, %v1487
      %v1508 = vadd.f32 %v1497, %v1488
      %v1509 = vadd.f32 %v1501, %v1489
      %v1510 = vadd.f32 %v1505, %v1490
      %v1511 = vmax.f32 %v1507, 0.0
      %v1512 = vmax.f32 %v1508, 0.0
      %v1513 = vmax.f32 %v1509, 0.0
      %v1514 = vmax.f32 %v1510, 0.0
      %v1515 = vmul.f32 %v1511, %v293
      %v1516 = vmul.f32 %v1512, %v298
      %v1517 = vmul.f32 %v1513, %v303
      %v1518 = vmul.f32 %v1514, %v308
      %v1519 = vadd.f32 %v1515, %v1516
      %v1520 = vadd.f32 %v1519, %v1517
      %v1521 = vadd.f32 %v1520, %v1518
      %v1522 = vrot.slane %v1521, 4
      %v1523 = vadd.f32 %v1521, %v1522
      %v1524 = vrot.slane %v1523, 2
      %v1525 = vadd.f32 %v1523, %v1524
      %v1526 = vrot.slane %v1525, 1
      %v1527 = vadd.f32 %v1525, %v1526
      %v1528 = vadd.f32 %v1486, %v1527
      %v1529 = vadd.f32 %v1528, %v324
      %s1530 = sadd.s32 %s326, 7
      %s1531 = scalar_lea.vmem [#allocation3], %s1530
      %1532 = vst [vmem:[%s1531] sm:$0x1] %v1529
    $region22: #{tpu_custom_call.1} parent=1 // loop_footer
      %s41 = sadd.s32 1, %s37
    $region23: #{tpu_custom_call.1} parent=1 // loop_footer_branch
      %36 = sbr.rel target = $region19
    $region24: #{tpu_custom_call.1} parent=1 // loop_exit
      _
    // Predicated region
    $region25: #{tpu_custom_call.1} parent=1 // pred_check
      _
    $region26: #{tpu_custom_call.1} parent=1 // pred_check_branch
      %1534 = sbr.rel (0) target = $region28
    $region27: #{tpu_custom_call.1} parent=1 // pred_region
      %1536 = vsyncadd [#allocation4], 0
      %s1537 = sshll.u32 [#allocation3], 4
      %s1538 = int_to_ptr.vmem [resolvable:$true] %s1537
      %s1539 = sshll.u32 %s4, 4
      %s1540 = int_to_ptr.hbm [resolvable:$true] %s1539
      %1545 = dma.vmem_to_hbm [thread:$0]  %s1538, 384, %s1540, [#allocation4], 128, 128, 8
    $region28: #{tpu_custom_call.1} parent=1 // pred_fallthru
      _
    // Predicated region
    $region29: #{tpu_custom_call.1} parent=1 // pred_check
      _
    $region30: #{tpu_custom_call.1} parent=1 // pred_check_branch
      %1547 = sbr.rel (0) target = $region32
    $region31: #{tpu_custom_call.1} parent=1 // pred_region
      %1549 = dma.done [#allocation4], 384
    $region32: #{tpu_custom_call.1} parent=1 // pred_fallthru
      _
    %1550 = vsyncpa [#allocation4], 1

</llo_original>
